<compile_context>
chip_gen: v7x
topology: tpu7x:2x2x1
jax: 0.10.0
libtpu: 0.0.40
codegen_flags: <defaults>
</compile_context>

<pallas_src>
import functools

import jax
import jax.numpy as jnp
from jax import lax
from jax.experimental import pallas as pl
from jax.experimental.pallas import tpu as pltpu


# --------------------------------------------------------------------------- #
# helpers
# --------------------------------------------------------------------------- #
def _one_hot(ids, n, dtype):
    """ids: (R, 1) int32 -> (R, n) one-hot.  Out-of-range ids give all-zero rows."""
    iota = lax.broadcasted_iota(jnp.int32, (ids.shape[0], n), 1)
    return jnp.where(ids == iota, jnp.ones((), dtype), jnp.zeros((), dtype))


def _vmem_limit_bytes():
    """Scoped VMEM limit derived from the physical capacity (v7x-safe)."""
    cap = 64 * 1024 * 1024
    try:
        info = pltpu.get_tpu_info()
        cap = int(getattr(info, "vmem_capacity_bytes", cap))
    except Exception:  # CPU / interpret / old runtime: fall back to 64 MiB
        pass
    return int(max(32 * 1024 * 1024, min(cap // 2, 96 * 1024 * 1024)))


def _pick_tile_e(num_edges, n, d, h, cdt_bytes, vmem_limit):
    """Largest edge tile (multiple of 128) whose working set fits the budget."""
    budget = vmem_limit - 6 * 1024 * 1024                       # Mosaic scratch headroom
    resident = (2 * cdt_bytes * (3 * n * d + d * h)             # Q, KV, s (double-buffered)
                + 2 * 4 * (n * d + h * n))                      # f32 accumulators
    best = 128
    for te in (512, 256, 128):
        per_tile = (2 * 2 * te * 4          # rows/cols blocks (double-buffered)
                    + 2 * 4 * h * te        # exp output block (double-buffered)
                    + 3 * 4 * te * n        # one-hot build temporaries
                    + 7 * 4 * te * d)       # q / kv / qk / exp_b / exp_b*v temporaries
        if resident + per_tile <= budget:
            best = te
            break
    # don't over-pad tiny graphs
    if num_edges <= 128:
        best = 128
    elif num_edges <= 256:
        best = min(best, 256)
    return best


# --------------------------------------------------------------------------- #
# kernel
# --------------------------------------------------------------------------- #
def _gt_edge_kernel(rows_ref, cols_ref, q_ref, kv_ref, s_ref,
                    res_ref, norm_ref, exp_ref, *, num_edges):
    """One edge tile: gather pre-projected q/k/v, exp scores, scatter-add partials.

    Grid = (core_split, edge_tile); the accumulators res_ref (1,N,D) and
    norm_ref (1,H,N) are per-core partials, resident across the edge-tile axis.
    """
    te = rows_ref.shape[0]
    n, d = q_ref.shape
    h = s_ref.shape[1]
    cdt = q_ref.dtype                    # MXU operand dtype (bf16 fast / f32 parity)
    f32 = jnp.float32
    t = pl.program_id(1)

    @pl.when(t == 0)
    def _init():
        res_ref[...] = jnp.zeros_like(res_ref)
        norm_ref[...] = jnp.zeros_like(norm_ref)

    # --- gather per-edge q / (k|v) from the pre-projected node tables (MXU) ---
    oh_row = _one_hot(rows_ref[...], n, cdt)                                   # (TE, N)
    oh_col = _one_hot(cols_ref[...], n, cdt)                                   # (TE, N)
    q = jnp.dot(oh_row, q_ref[...], preferred_element_type=f32)                # (TE, D)
    kv = jnp.dot(oh_col, kv_ref[...], preferred_element_type=f32)              # (TE, 2D)
    k = kv[:, :d]
    v = kv[:, d:]

    # --- per-head scores in a lane-dense (H, TE) layout ---
    s = s_ref[...].astype(f32)                                                 # (D, H) 0/1
    att_t = lax.dot_general(s, q * k, (((0,), (1,)), ((), ())),
                            preferred_element_type=f32)                        # (H, TE)
    exp_t = jnp.exp(jnp.clip(att_t, -10.0, 10.0))                              # (H, TE)

    # mask padded edges (global edge index >= num_edges) to exactly zero
    base = (pl.program_id(0) * pl.num_programs(1) + t) * te
    eidx = base + lax.broadcasted_iota(jnp.int32, (h, te), 1)
    exp_t = jnp.where(eidx < num_edges, exp_t, 0.0)
    exp_ref[...] = exp_t

    # --- segment scatter-add over destination nodes (contract the edge axis) ---
    # bf16 operands in the fast path (one-hot is exact in bf16), f32 accumulation.
    norm_ref[...] += lax.dot_general(exp_t.astype(cdt), oh_row,
                                     (((1,), (0,)), ((), ())),
                                     preferred_element_type=f32)[None]         # (1, H, N)
    exp_b = lax.dot_general(exp_t, s, (((0,), (1,)), ((), ())),
                            preferred_element_type=f32)                        # (TE, D)
    res_ref[...] += lax.dot_general(oh_row, (exp_b * v).astype(cdt),
                                    (((0,), (0,)), ((), ())),
                                    preferred_element_type=f32)[None]          # (1, N, D)


# --------------------------------------------------------------------------- #
# wrapper
# --------------------------------------------------------------------------- #
def gt_layer_forward(rows, cols, embeds, wq, wk, wv, num_nodes, head,
                     *, tile_e=None, mxu_dtype=jnp.bfloat16, core_splits=2):
    """Pallas-backed GTLayer.forward.  Returns (resEmbeds [N, D], att [E, H])."""
    num_edges = int(rows.shape[0])
    n, d = embeds.shape
    h = head
    assert n == num_nodes and d % h == 0
    dh = d // h
    f32 = jnp.float32

    # ---- opt #1: pre-project the node table once (O(N*D^2) instead of O(E*D^2)) ----
    q_nodes = jnp.dot(embeds, wq, preferred_element_type=f32).astype(mxu_dtype)     # (N, D)
    kv_nodes = jnp.dot(embeds, jnp.concatenate([wk, wv], axis=1),
                       preferred_element_type=f32).astype(mxu_dtype)                # (N, 2D)
    s = jnp.repeat(jnp.eye(h, dtype=f32), dh, axis=0)                               # (D, H)

    cdt_bytes = jnp.dtype(mxu_dtype).itemsize
    vmem_limit = _vmem_limit_bytes()
    te = _pick_tile_e(num_edges, n, d, h, cdt_bytes, vmem_limit) if tile_e is None else tile_e
    assert te % 128 == 0, "edge tile must be a multiple of 128"

    splits = max(1, int(core_splits))               # leading 'parallel' axis (v7x dual-TC)
    tiles_per_core = max(1, -(-num_edges // (te * splits)))
    e_pad = splits * tiles_per_core * te
    T = tiles_per_core

    # Pad edge lists with index == N: out-of-range -> all-zero one-hot -> no-op edge.
    rows_p = jnp.full((e_pad, 1), n, jnp.int32).at[:num_edges, 0].set(rows.astype(jnp.int32))
    cols_p = jnp.full((e_pad, 1), n, jnp.int32).at[:num_edges, 0].set(cols.astype(jnp.int32))

    kernel = functools.partial(_gt_edge_kernel, num_edges=num_edges)

    cost = pl.CostEstimate(
        flops=int(2 * e_pad * n * (4 * d + h) + 4 * e_pad * d * h),
        transcendentals=int(e_pad * h),
        bytes_accessed=int(e_pad * 2 * 4
                           + (3 * n * d + d * h) * cdt_bytes
                           + (splits * (n * d + h * n) + h * e_pad) * 4),
    )

    res_parts, norm_parts, exp_t = pl.pallas_call(
        kernel,
        grid=(splits, tiles_per_core),
        in_specs=[
            pl.BlockSpec((te, 1), lambda c, t: (c * T + t, 0)),        # rows (per tile)
            pl.BlockSpec((te, 1), lambda c, t: (c * T + t, 0)),        # cols (per tile)
            pl.BlockSpec((n, d), lambda c, t: (0, 0)),                 # Q node table (resident)
            pl.BlockSpec((n, 2 * d), lambda c, t: (0, 0)),             # K|V node table (resident)
            pl.BlockSpec((d, h), lambda c, t: (0, 0)),                 # head-sum matrix
        ],
        out_specs=(
            pl.BlockSpec((1, n, d), lambda c, t: (c, 0, 0)),           # per-core res partial
            pl.BlockSpec((1, h, n), lambda c, t: (c, 0, 0)),           # per-core norm partial
            pl.BlockSpec((h, te), lambda c, t: (0, c * T + t)),        # exp scores (lane-dense)
        ),
        out_shape=(
            jax.ShapeDtypeStruct((splits, n, d), f32),
            jax.ShapeDtypeStruct((splits, h, n), f32),
            jax.ShapeDtypeStruct((h, e_pad), f32),
        ),
        compiler_params=pltpu.CompilerParams(
            dimension_semantics=("parallel", "arbitrary"),
            vmem_limit_bytes=vmem_limit,
        ),
        cost_estimate=cost,
    )(rows_p, cols_p, q_nodes, kv_nodes, s)

    # ---- wrapper-side reduction / normalization (opt #3 / #4) ----
    norm_hn = norm_parts.sum(axis=0)                                   # (H, N)
    res_num = res_parts.sum(axis=0)                                    # (N, D)

    # att[e, h] = exp[e, h] / (norm[rows[e], h] + eps)  -- trivial XLA gather
    att = (exp_t[:, :num_edges] / (norm_hn[:, rows] + 1e-8)).T          # (E, H)

    # divide the scattered numerator by the per-node/per-head norm (same math as
    # dividing per edge before the scatter, since the denominator is per destination)
    denom = jnp.repeat(norm_hn.T, dh, axis=1)                          # (N, D)
    res = res_num / (denom + 1e-8)
    return res, att


# --------------------------------------------------------------------------- #
# references (pure JAX, mirroring the PyTorch forward)
# --------------------------------------------------------------------------- #
def gt_layer_reference(rows, cols, embeds, wq, wk, wv, num_nodes, head):
    d = embeds.shape[1]
    dh = d // head
    row_e = embeds[rows]
    col_e = embeds[cols]
    q = (row_e @ wq).reshape(-1, head, dh)
    k = (col_e @ wk).reshape(-1, head, dh)
    v = (col_e @ wv).reshape(-1, head, dh)
    att = jnp.clip(jnp.einsum('ehd,ehd->eh', q, k), -10.0, 10.0)
    exp_att = jnp.exp(att)
    norm = jnp.zeros((num_nodes, head), jnp.float32).at[rows].add(exp_att)[rows]
    att = exp_att / (norm + 1e-8)
    res_e = (att[:, :, None] * v).reshape(-1, d)
    res = jnp.zeros((num_nodes, d), jnp.float32).at[rows].add(res_e)
    return res, att


def gt_layer_reference_from_tables(rows, cols, q_tab, k_tab, v_tab, num_nodes, head):
    """Same math but starting from (possibly quantized) pre-projected node tables."""
    d = q_tab.shape[1]
    dh = d // head
    q = q_tab[rows].reshape(-1, head, dh)
    k = k_tab[cols].reshape(-1, head, dh)
    v = v_tab[cols].reshape(-1, head, dh)
    att = jnp.clip(jnp.einsum('ehd,ehd->eh', q, k), -10.0, 10.0)
    exp_att = jnp.exp(att)
    norm = jnp.zeros((num_nodes, head), jnp.float32).at[rows].add(exp_att)[rows]
    att = exp_att / (norm + 1e-8)
    res_e = (att[:, :, None] * v).reshape(-1, d)
    res = jnp.zeros((num_nodes, d), jnp.float32).at[rows].add(res_e)
    return res, att


def xavier_uniform(key, shape):
    fan_in, fan_out = shape
    bound = (6.0 / (fan_in + fan_out)) ** 0.5
    return jax.random.uniform(key, shape, jnp.float32, -bound, bound)


if __name__ == "__main__":
    # small synthetic config: args.latdim = 32, args.head = 4
    N = 16       # number of nodes (adj.shape[0])
    D = 32       # latdim
    H = 4        # head
    E = 608      # number of nonzero entries (edges); not a tile multiple on purpose

    key = jax.random.PRNGKey(0)
    k_emb, k_rows, k_cols, k_q, k_k, k_v = jax.random.split(key, 6)

    embeds = jax.random.normal(k_emb, (N, D), jnp.float32)
    rows = jax.random.randint(k_rows, (E,), 0, N, jnp.int32)
    cols = jax.random.randint(k_cols, (E,), 0, N, jnp.int32)

    wq = xavier_uniform(k_q, (D, D))
    wk = xavier_uniform(k_k, (D, D))
    wv = xavier_uniform(k_v, (D, D))

    # --- exact-parity path (f32 MXU operands, TE=128) vs the PyTorch-equivalent reference ---
    res32, att32 = gt_layer_forward(rows, cols, embeds, wq, wk, wv, N, H,
                                    tile_e=128, mxu_dtype=jnp.float32)
    jax.block_until_ready((res32, att32))
    res_ref, att_ref = gt_layer_reference(rows, cols, embeds, wq, wk, wv, N, H)
    assert jnp.allclose(res32, res_ref, atol=1e-4, rtol=1e-4), "resEmbeds mismatch (f32)"
    assert jnp.allclose(att32, att_ref, atol=1e-4, rtol=1e-4), "att mismatch (f32)"

    # --- optimized bf16-MXU path (auto tile) vs a reference using the same bf16-rounded
    #     pre-projected node tables (the fast path's quantization points) ---
    res16, att16 = gt_layer_forward(rows, cols, embeds, wq, wk, wv, N, H,
                                    mxu_dtype=jnp.bfloat16)
    jax.block_until_ready((res16, att16))
    f32 = jnp.float32
    rd = lambda x: x.astype(jnp.bfloat16).astype(f32)
    q_tab = rd(jnp.dot(embeds, wq, preferred_element_type=f32))
    kv_tab = rd(jnp.dot(embeds, jnp.concatenate([wk, wv], axis=1),
                        preferred_element_type=f32))
    res_r16, att_r16 = gt_layer_reference_from_tables(
        rows, cols, q_tab, kv_tab[:, :D], kv_tab[:, D:], N, H)
    assert jnp.allclose(res16, res_r16, atol=2e-2, rtol=2e-2), "resEmbeds mismatch (bf16)"
    assert jnp.allclose(att16, att_r16, atol=2e-2, rtol=2e-2), "att mismatch (bf16)"

    print("KERNEL_OK")
</pallas_src>

<mosaic_0001>
module attributes {stable_mosaic.version = 11 : i64} {
  func.func @_gt_edge_kernel(%arg0: i32, %arg1: i32, %arg2: memref<128x1xi32, #tpu.memory_space<vmem>>, %arg3: memref<128x1xi32, #tpu.memory_space<vmem>>, %arg4: memref<16x32xf32, #tpu.memory_space<vmem>>, %arg5: memref<16x64xf32, #tpu.memory_space<vmem>>, %arg6: memref<32x4xf32, #tpu.memory_space<vmem>>, %arg7: memref<1x16x32xf32, #tpu.memory_space<vmem>>, %arg8: memref<1x4x16xf32, #tpu.memory_space<vmem>>, %arg9: memref<4x128xf32, #tpu.memory_space<vmem>>) attributes {dimension_semantics = [#tpu.dimension_semantics<parallel>, #tpu.dimension_semantics<arbitrary>], iteration_bounds = array<i64: 2, 3>, scalar_prefetch = 0 : i64, scratch_operands = 0 : i64, tpu.core_type = #tpu.core_type<tc>, window_params = [{transform_indices = @transform_0, window_bounds = array<i64: 128, 1>}, {transform_indices = @transform_1, window_bounds = array<i64: 128, 1>}, {pipeline_mode = #tpu.pipeline_mode<synchronous>, transform_indices = @transform_2, window_bounds = array<i64: 16, 32>}, {pipeline_mode = #tpu.pipeline_mode<synchronous>, transform_indices = @transform_3, window_bounds = array<i64: 16, 64>}, {pipeline_mode = #tpu.pipeline_mode<synchronous>, transform_indices = @transform_4, window_bounds = array<i64: 32, 4>}, {transform_indices = @transform_5, window_bounds = array<i64: 1, 16, 32>}, {transform_indices = @transform_6, window_bounds = array<i64: 1, 4, 16>}, {transform_indices = @transform_7, window_bounds = array<i64: 4, 128>}]} {
    %c0_i32 = arith.constant 0 : i32
    %0 = arith.cmpi eq, %arg1, %c0_i32 : i32
    %1 = arith.extui %0 : i1 to i32
    %c0_i32_0 = arith.constant 0 : i32
    %2 = arith.cmpi ne, %1, %c0_i32_0 : i32
    scf.if %2 {
      %cst_36 = arith.constant 0.000000e+00 : f32
      %54 = vector.broadcast %cst_36 : f32 to vector<1x16x32xf32>
      %c0_37 = arith.constant 0 : index
      %c0_38 = arith.constant 0 : index
      %c0_39 = arith.constant 0 : index
      %55 = vector.load %arg7[%c0_37, %c0_38, %c0_39] : memref<1x16x32xf32, #tpu.memory_space<vmem>>, vector<1x16x32xf32>
      tpu.vector_store %arg7[%c0_37, %c0_38, %c0_39], %54 {strides = array<i32>} : memref<1x16x32xf32, #tpu.memory_space<vmem>>, vector<1x16x32xf32>,
      %cst_40 = arith.constant 0.000000e+00 : f32
      %56 = vector.broadcast %cst_40 : f32 to vector<1x4x16xf32>
      %c0_41 = arith.constant 0 : index
      %c0_42 = arith.constant 0 : index
      %c0_43 = arith.constant 0 : index
      %57 = vector.load %arg8[%c0_41, %c0_42, %c0_43] : memref<1x4x16xf32, #tpu.memory_space<vmem>>, vector<1x4x16xf32>
      tpu.vector_store %arg8[%c0_41, %c0_42, %c0_43], %56 {strides = array<i32>} : memref<1x4x16xf32, #tpu.memory_space<vmem>>, vector<1x4x16xf32>,
    } else {
    }
    %c0 = arith.constant 0 : index
    %c0_1 = arith.constant 0 : index
    %3 = vector.load %arg2[%c0, %c0_1] : memref<128x1xi32, #tpu.memory_space<vmem>>, vector<128x1xi32>
    %4 = tpu.iota {dimensions = array<i32: 1>} : vector<128x16xi32>
    %5 = vector.broadcast %3 : vector<128x1xi32> to vector<128x16xi32>
    %6 = arith.cmpi eq, %5, %4 : vector<128x16xi32>
    %cst = arith.constant 1.000000e+00 : f32
    %cst_2 = arith.constant 0.000000e+00 : f32
    %7 = vector.broadcast %cst : f32 to vector<128x16xf32>
    %8 = vector.broadcast %cst_2 : f32 to vector<128x16xf32>
    %9 = arith.select %6, %7, %8 : vector<128x16xi1>, vector<128x16xf32>
    %c0_3 = arith.constant 0 : index
    %c0_4 = arith.constant 0 : index
    %10 = vector.load %arg3[%c0_3, %c0_4] : memref<128x1xi32, #tpu.memory_space<vmem>>, vector<128x1xi32>
    %11 = tpu.iota {dimensions = array<i32: 1>} : vector<128x16xi32>
    %12 = vector.broadcast %10 : vector<128x1xi32> to vector<128x16xi32>
    %13 = arith.cmpi eq, %12, %11 : vector<128x16xi32>
    %cst_5 = arith.constant 1.000000e+00 : f32
    %cst_6 = arith.constant 0.000000e+00 : f32
    %14 = vector.broadcast %cst_5 : f32 to vector<128x16xf32>
    %15 = vector.broadcast %cst_6 : f32 to vector<128x16xf32>
    %16 = arith.select %13, %14, %15 : vector<128x16xi1>, vector<128x16xf32>
    %c0_7 = arith.constant 0 : index
    %c0_8 = arith.constant 0 : index
    %17 = vector.load %arg4[%c0_7, %c0_8] : memref<16x32xf32, #tpu.memory_space<vmem>>, vector<16x32xf32>
    %cst_9 = arith.constant dense<0.000000e+00> : vector<128x32xf32>
    %18 = tpu.matmul %9, %17, %cst_9 {dimension_numbers = #tpu.dot_dimension_numbers<[1], [0], [0], [1], [0, 0, 1, 1], [], []>} : vector<128x16xf32>, vector<16x32xf32>, vector<128x32xf32> -> vector<128x32xf32>
    %c0_10 = arith.constant 0 : index
    %c0_11 = arith.constant 0 : index
    %19 = vector.load %arg5[%c0_10, %c0_11] : memref<16x64xf32, #tpu.memory_space<vmem>>, vector<16x64xf32>
    %cst_12 = arith.constant dense<0.000000e+00> : vector<128x64xf32>
    %20 = tpu.matmul %16, %19, %cst_12 {dimension_numbers = #tpu.dot_dimension_numbers<[1], [0], [0], [1], [0, 0, 1, 1], [], []>} : vector<128x16xf32>, vector<16x64xf32>, vector<128x64xf32> -> vector<128x64xf32>
    %21 = vector.extract_strided_slice %20 {offsets = [0, 0], sizes = [128, 32], strides = [1, 1]} : vector<128x64xf32> to vector<128x32xf32>
    %22 = vector.extract_strided_slice %20 {offsets = [0, 32], sizes = [128, 32], strides = [1, 1]} : vector<128x64xf32> to vector<128x32xf32>
    %c0_13 = arith.constant 0 : index
    %c0_14 = arith.constant 0 : index
    %23 = vector.load %arg6[%c0_13, %c0_14] : memref<32x4xf32, #tpu.memory_space<vmem>>, vector<32x4xf32>
    %24 = arith.mulf %18, %21 : vector<128x32xf32>
    %cst_15 = arith.constant dense<0.000000e+00> : vector<4x128xf32>
    %25 = tpu.matmul %23, %24, %cst_15 {dimension_numbers = #tpu.dot_dimension_numbers<[0], [1], [1], [0], [0, 1, 1, 0], [], []>} : vector<32x4xf32>, vector<128x32xf32>, vector<4x128xf32> -> vector<4x128xf32>
    %cst_16 = arith.constant -1.000000e+01 : f32
    %cst_17 = arith.constant 1.000000e+01 : f32
    %26 = vector.broadcast %cst_16 : f32 to vector<4x128xf32>
    %27 = arith.maximumf %26, %25 : vector<4x128xf32>
    %28 = vector.broadcast %cst_17 : f32 to vector<4x128xf32>
    %29 = arith.minimumf %28, %27 : vector<4x128xf32>
    %30 = math.exp %29 : vector<4x128xf32>
    %c3_i32 = arith.constant 3 : i32
    %31 = arith.muli %arg0, %c3_i32 : i32
    %32 = arith.addi %31, %arg1 : i32
    %c128_i32 = arith.constant 128 : i32
    %33 = arith.muli %32, %c128_i32 : i32
    %34 = tpu.iota {dimensions = array<i32: 1>} : vector<4x128xi32>
    %35 = vector.broadcast %33 : i32 to vector<4x128xi32>
    %36 = arith.addi %35, %34 : vector<4x128xi32>
    %c608_i32 = arith.constant 608 : i32
    %37 = vector.broadcast %c608_i32 : i32 to vector<4x128xi32>
    %38 = arith.cmpi slt, %36, %37 : vector<4x128xi32>
    %cst_18 = arith.constant 0.000000e+00 : f32
    %39 = vector.broadcast %cst_18 : f32 to vector<4x128xf32>
    %40 = arith.select %38, %30, %39 : vector<4x128xi1>, vector<4x128xf32>
    %c0_19 = arith.constant 0 : index
    %c0_20 = arith.constant 0 : index
    %41 = vector.load %arg9[%c0_19, %c0_20] : memref<4x128xf32, #tpu.memory_space<vmem>>, vector<4x128xf32>
    tpu.vector_store %arg9[%c0_19, %c0_20], %40 {strides = array<i32>} : memref<4x128xf32, #tpu.memory_space<vmem>>, vector<4x128xf32>,
    %c0_21 = arith.constant 0 : index
    %c0_22 = arith.constant 0 : index
    %c0_23 = arith.constant 0 : index
    %42 = vector.load %arg8[%c0_21, %c0_22, %c0_23] : memref<1x4x16xf32, #tpu.memory_space<vmem>>, vector<1x4x16xf32>
    %cst_24 = arith.constant dense<0.000000e+00> : vector<4x16xf32>
    %43 = tpu.matmul %40, %9, %cst_24 {dimension_numbers = #tpu.dot_dimension_numbers<[1], [0], [0], [1], [0, 0, 1, 1], [], []>} : vector<4x128xf32>, vector<128x16xf32>, vector<4x16xf32> -> vector<4x16xf32>
    %44 = vector.shape_cast %43 : vector<4x16xf32> to vector<1x4x16xf32>
    %45 = arith.addf %42, %44 : vector<1x4x16xf32>
    %c0_25 = arith.constant 0 : index
    %c0_26 = arith.constant 0 : index
    %c0_27 = arith.constant 0 : index
    %46 = vector.load %arg8[%c0_25, %c0_26, %c0_27] : memref<1x4x16xf32, #tpu.memory_space<vmem>>, vector<1x4x16xf32>
    tpu.vector_store %arg8[%c0_25, %c0_26, %c0_27], %45 {strides = array<i32>} : memref<1x4x16xf32, #tpu.memory_space<vmem>>, vector<1x4x16xf32>,
    %cst_28 = arith.constant dense<0.000000e+00> : vector<128x32xf32>
    %47 = tpu.matmul %40, %23, %cst_28 {dimension_numbers = #tpu.dot_dimension_numbers<[0], [1], [1], [0], [0, 1, 1, 0], [], []>} : vector<4x128xf32>, vector<32x4xf32>, vector<128x32xf32> -> vector<128x32xf32>
    %c0_29 = arith.constant 0 : index
    %c0_30 = arith.constant 0 : index
    %c0_31 = arith.constant 0 : index
    %48 = vector.load %arg7[%c0_29, %c0_30, %c0_31] : memref<1x16x32xf32, #tpu.memory_space<vmem>>, vector<1x16x32xf32>
    %49 = arith.mulf %47, %22 : vector<128x32xf32>
    %cst_32 = arith.constant dense<0.000000e+00> : vector<16x32xf32>
    %50 = tpu.matmul %9, %49, %cst_32 {dimension_numbers = #tpu.dot_dimension_numbers<[0], [0], [1], [1], [0, 1, 1, 1], [], []>} : vector<128x16xf32>, vector<128x32xf32>, vector<16x32xf32> -> vector<16x32xf32>
    %51 = vector.shape_cast %50 : vector<16x32xf32> to vector<1x16x32xf32>
    %52 = arith.addf %48, %51 : vector<1x16x32xf32>
    %c0_33 = arith.constant 0 : index
    %c0_34 = arith.constant 0 : index
    %c0_35 = arith.constant 0 : index
    %53 = vector.load %arg7[%c0_33, %c0_34, %c0_35] : memref<1x16x32xf32, #tpu.memory_space<vmem>>, vector<1x16x32xf32>
    tpu.vector_store %arg7[%c0_33, %c0_34, %c0_35], %52 {strides = array<i32>} : memref<1x16x32xf32, #tpu.memory_space<vmem>>, vector<1x16x32xf32>,
    return
  }
  func.func @transform_0(%arg0: i32, %arg1: i32) -> (i32, i32) {
    %c3_i32 = arith.constant 3 : i32
    %0 = arith.muli %arg0, %c3_i32 : i32
    %1 = arith.addi %0, %arg1 : i32
    %c0_i32 = arith.constant 0 : i32
    %c0_i32_0 = arith.constant 0 : i32
    return %1, %c0_i32 : i32, i32
  }
  func.func @transform_1(%arg0: i32, %arg1: i32) -> (i32, i32) {
    %c3_i32 = arith.constant 3 : i32
    %0 = arith.muli %arg0, %c3_i32 : i32
    %1 = arith.addi %0, %arg1 : i32
    %c0_i32 = arith.constant 0 : i32
    %c0_i32_0 = arith.constant 0 : i32
    return %1, %c0_i32 : i32, i32
  }
  func.func @transform_2(%arg0: i32, %arg1: i32) -> (i32, i32) {
    %c0_i32 = arith.constant 0 : i32
    %c0_i32_0 = arith.constant 0 : i32
    %c0_i32_1 = arith.constant 0 : i32
    return %c0_i32, %c0_i32_0 : i32, i32
  }
  func.func @transform_3(%arg0: i32, %arg1: i32) -> (i32, i32) {
    %c0_i32 = arith.constant 0 : i32
    %c0_i32_0 = arith.constant 0 : i32
    %c0_i32_1 = arith.constant 0 : i32
    return %c0_i32, %c0_i32_0 : i32, i32
  }
  func.func @transform_4(%arg0: i32, %arg1: i32) -> (i32, i32) {
    %c0_i32 = arith.constant 0 : i32
    %c0_i32_0 = arith.constant 0 : i32
    %c0_i32_1 = arith.constant 0 : i32
    return %c0_i32, %c0_i32_0 : i32, i32
  }
  func.func @transform_5(%arg0: i32, %arg1: i32) -> (i32, i32, i32) {
    %c0_i32 = arith.constant 0 : i32
    %c0_i32_0 = arith.constant 0 : i32
    %c0_i32_1 = arith.constant 0 : i32
    return %arg0, %c0_i32, %c0_i32_0 : i32, i32, i32
  }
  func.func @transform_6(%arg0: i32, %arg1: i32) -> (i32, i32, i32) {
    %c0_i32 = arith.constant 0 : i32
    %c0_i32_0 = arith.constant 0 : i32
    %c0_i32_1 = arith.constant 0 : i32
    return %arg0, %c0_i32, %c0_i32_0 : i32, i32, i32
  }
  func.func @transform_7(%arg0: i32, %arg1: i32) -> (i32, i32) {
    %c3_i32 = arith.constant 3 : i32
    %0 = arith.muli %arg0, %c3_i32 : i32
    %1 = arith.addi %0, %arg1 : i32
    %c0_i32 = arith.constant 0 : i32
    %c0_i32_0 = arith.constant 0 : i32
    return %c0_i32, %1 : i32, i32
  }
}

</mosaic_0001>

<llo_original>
// kernel: tpu_custom_call.1
$region0: #{tpu_custom_call.1}
  #allocation0 [shape = 'u32[]', space=smem, size = 0x4, offset = 0x4, fixed_abs, tag = 'smem constant byte address 0x4 - core index']
  #allocation1 [shape = 'u32[144,128]{1,0:T(1,128)}', space=vmem, size = 0x12000, scoped, tag = 'internal scratch']
  %s0 = inlined_call_operand.vmem [shape: s32[768,1], index: 0, kind: input, shape index: {}]
  %s1 = inlined_call_operand.vmem [shape: s32[768,1], index: 1, kind: input, shape index: {}]
  %s2 = inlined_call_operand.vmem [shape: f32[16,32], index: 2, kind: input, shape index: {}]
  %s3 = inlined_call_operand.vmem [shape: f32[16,64], index: 3, kind: input, shape index: {}]
  %s4 = inlined_call_operand.vmem [shape: f32[32,4], index: 4, kind: input, shape index: {}]
  %s5 = inlined_call_operand.hbm [shape: f32[2,16,32], index: 5, kind: output, shape index: {0}]
  %s6 = inlined_call_operand.hbm [shape: f32[2,4,16], index: 6, kind: output, shape index: {1}]
  %s7 = inlined_call_operand.hbm [shape: f32[4,768], index: 7, kind: output, shape index: {2}]
  %8 = xla_tuple %s5, %s6, %s7
  %s9 = sld [smem:[#allocation0]]
  $region73: #{tpu_custom_call.1} parent=0
    _
  %s11 = ssub.s32 1, %s9
  %s12 = scalar_select 0, %s11, %s9
  $region1: #{tpu_custom_call.1} parent=0
    #allocation2 [shape = 'u8[16384]{0}', space=vmem, size = 0x4000, scoped, tag = 'output window, operand 0']
    #allocation3 [shape = 's32[2]{0}', space=sflag, size = 0x8, scoped, tag = 'scoped memory for tpu_custom_call.1']
    #allocation4 [shape = 'u8[4096]{0}', space=vmem, size = 0x1000, scoped, tag = 'output window, operand 1']
    #allocation5 [shape = 's32[2]{0}', space=sflag, size = 0x8, scoped, tag = 'scoped memory for tpu_custom_call.1']
    #allocation6 [shape = 'u8[4096]{0}', space=vmem, size = 0x1000, scoped, tag = 'output window, operand 2']
    %13 = vsyncpa [#allocation3], 0
    %s14 = scalar_lea.sflag [#allocation3], 1
    %15 = vsyncpa %s14, 0
    %16 = vsyncpa [#allocation5], 0
    %s17 = scalar_lea.sflag [#allocation5], 1
    %18 = vsyncpa %s17, 0
    loop: start=0, step=1, limit=8
    $region2: #{tpu_custom_call.1} parent=1 // loop_pre_header
      _
    $region3: #{tpu_custom_call.1} parent=1 // loop_header
      %s20 = sphi 0, %s24
      %p21 = scmp.ge.s32.totalorder %s20, 8
      %s27 = sphi 0, %s39
      %s28 = sphi 0, %s35
      %s29 = sphi 0, %s27
      %s30 = sphi 0, %s28
      %s31 = sphi 0, %s29
      %s32 = sphi 0, %s30
      %s46 = sphi 0, %s48
      %s49 = sphi 0, %s46
      %s50 = sphi 0, %s49
      %s66 = sphi 0, %s50
      %s76 = sphi 0, %s78
      %s79 = sphi 0, %s76
      %s80 = sphi 0, %s79
      %s96 = sphi 0, %s80
      %s100 = sphi 0, %s100
      %s102 = sphi 0, %s100
      %s103 = sphi 0, %s102
      %s117 = sphi 0, %s103
      %s121 = sphi 0, %s121
      %s123 = sphi 0, %s121
      %s124 = sphi 0, %s123
      %s138 = sphi 0, %s124
      %s142 = sphi 0, %s142
      %s144 = sphi 0, %s142
      %s145 = sphi 0, %s144
      %s159 = sphi 0, %s145
      %s165 = sphi 0, %s167
      %s168 = sphi 0, %s165
      %s169 = sphi 0, %s168
      %s185 = sphi 0, %s169
      %s191 = sphi 0, %s193
      %s194 = sphi 0, %s191
      %s195 = sphi 0, %s194
      %s211 = sphi 0, %s195
      %s221 = sphi 0, %s223
      %s224 = sphi 0, %s221
      %s225 = sphi 0, %s224
      %s241 = sphi 0, %s225
    $region4: #{tpu_custom_call.1} parent=1 // loop_header_branch
      %23 = sbr.rel (%p21) target = $region8
    $region5: #{tpu_custom_call.1} parent=1 // loop_body
      %s25 = ssub.s32 %s20, 1
      %s26 = ssub.s32 %s20, 2
      %s33 = sadd.s32 1, %s28
      %p34 = scmp.ge.s32.totalorder %s33, 3
      %s35 = scalar_select %p34, 0, %s33
      %s36 = sadd.s32 1, %s27
      %s37 = scalar_select %p34, %s36, %s27
      %p38 = scmp.ge.s32.totalorder %s37, 2
      %s39 = scalar_select %p38, 0, %s37
      %s40 = smul.u32 %s27, 3
      %s41 = sadd.s32 %s40, %s28
      %s42 = smul.u32 %s39, 3
      %s43 = sadd.s32 %s42, %s35
      %s44 = ssub.s32 %s41, %s43
      %p45 = scmp.eq.s32.totalorder %s44, 0
      %s47 = sadd.s32 %s46, 1
      %s48 = scalar_select %p45, %s46, %s47
      %p51 = pneg %p45
      %p52 = scmp.eq.s32.totalorder %s20, 5
      %p53 = por %p51, %p52
      %p54 = scmp.ne.s32.totalorder %s46, %s49
      %p55 = scmp.eq.s32.totalorder %s20, 0
      %p56 = por %p54, %p55
      %p57 = scmp.ne.s32.totalorder %s46, %s49
      %p58 = scmp.eq.s32.totalorder %s25, 5
      %p59 = por %p57, %p58
      %p60 = scmp.ne.s32.totalorder %s49, %s50
      %p61 = scmp.eq.s32.totalorder %s25, 0
      %p62 = por %p60, %p61
      %p63 = scmp.ne.s32.totalorder %s49, %s50
      %p64 = scmp.eq.s32.totalorder %s26, 5
      %p65 = por %p63, %p64
      %p67 = scmp.ne.s32.totalorder %s50, %s66
      %p68 = scmp.eq.s32.totalorder %s26, 0
      %p69 = por %p67, %p68
      %s70 = smul.u32 %s27, 3
      %s71 = sadd.s32 %s70, %s28
      %s72 = smul.u32 %s39, 3
      %s73 = sadd.s32 %s72, %s35
      %s74 = ssub.s32 %s71, %s73
      %p75 = scmp.eq.s32.totalorder %s74, 0
      %s77 = sadd.s32 %s76, 1
      %s78 = scalar_select %p75, %s76, %s77
      %p81 = pneg %p75
      %p82 = scmp.eq.s32.totalorder %s20, 5
      %p83 = por %p81, %p82
      %p84 = scmp.ne.s32.totalorder %s76, %s79
      %p85 = scmp.eq.s32.totalorder %s20, 0
      %p86 = por %p84, %p85
      %p87 = scmp.ne.s32.totalorder %s76, %s79
      %p88 = scmp.eq.s32.totalorder %s25, 5
      %p89 = por %p87, %p88
      %p90 = scmp.ne.s32.totalorder %s79, %s80
      %p91 = scmp.eq.s32.totalorder %s25, 0
      %p92 = por %p90, %p91
      %p93 = scmp.ne.s32.totalorder %s79, %s80
      %p94 = scmp.eq.s32.totalorder %s26, 5
      %p95 = por %p93, %p94
      %p97 = scmp.ne.s32.totalorder %s80, %s96
      %p98 = scmp.eq.s32.totalorder %s26, 0
      %p99 = por %p97, %p98
      %s101 = sadd.s32 %s100, 1
      %p104 = scmp.eq.s32.totalorder %s20, 5
      %p105 = scmp.ne.s32.totalorder %s100, %s102
      %p106 = scmp.eq.s32.totalorder %s20, 0
      %p107 = por %p105, %p106
      %p108 = scmp.ne.s32.totalorder %s100, %s102
      %p109 = scmp.eq.s32.totalorder %s25, 5
      %p110 = por %p108, %p109
      %p111 = scmp.ne.s32.totalorder %s102, %s103
      %p112 = scmp.eq.s32.totalorder %s25, 0
      %p113 = por %p111, %p112
      %p114 = scmp.ne.s32.totalorder %s102, %s103
      %p115 = scmp.eq.s32.totalorder %s26, 5
      %p116 = por %p114, %p115
      %p118 = scmp.ne.s32.totalorder %s103, %s117
      %p119 = scmp.eq.s32.totalorder %s26, 0
      %p120 = por %p118, %p119
      %s122 = sadd.s32 %s121, 1
      %p125 = scmp.eq.s32.totalorder %s20, 5
      %p126 = scmp.ne.s32.totalorder %s121, %s123
      %p127 = scmp.eq.s32.totalorder %s20, 0
      %p128 = por %p126, %p127
      %p129 = scmp.ne.s32.totalorder %s121, %s123
      %p130 = scmp.eq.s32.totalorder %s25, 5
      %p131 = por %p129, %p130
      %p132 = scmp.ne.s32.totalorder %s123, %s124
      %p133 = scmp.eq.s32.totalorder %s25, 0
      %p134 = por %p132, %p133
      %p135 = scmp.ne.s32.totalorder %s123, %s124
      %p136 = scmp.eq.s32.totalorder %s26, 5
      %p137 = por %p135, %p136
      %p139 = scmp.ne.s32.totalorder %s124, %s138
      %p140 = scmp.eq.s32.totalorder %s26, 0
      %p141 = por %p139, %p140
      %s143 = sadd.s32 %s142, 1
      %p146 = scmp.eq.s32.totalorder %s20, 5
      %p147 = scmp.ne.s32.totalorder %s142, %s144
      %p148 = scmp.eq.s32.totalorder %s20, 0
      %p149 = por %p147, %p148
      %p150 = scmp.ne.s32.totalorder %s142, %s144
      %p151 = scmp.eq.s32.totalorder %s25, 5
      %p152 = por %p150, %p151
      %p153 = scmp.ne.s32.totalorder %s144, %s145
      %p154 = scmp.eq.s32.totalorder %s25, 0
      %p155 = por %p153, %p154
      %p156 = scmp.ne.s32.totalorder %s144, %s145
      %p157 = scmp.eq.s32.totalorder %s26, 5
      %p158 = por %p156, %p157
      %p160 = scmp.ne.s32.totalorder %s145, %s159
      %p161 = scmp.eq.s32.totalorder %s26, 0
      %p162 = por %p160, %p161
      %s163 = ssub.s32 %s27, %s39
      %p164 = scmp.eq.s32.totalorder %s163, 0
      %s166 = sadd.s32 %s165, 1
      %s167 = scalar_select %p164, %s165, %s166
      %p170 = pneg %p164
      %p171 = scmp.eq.s32.totalorder %s20, 5
      %p172 = por %p170, %p171
      %p173 = scmp.ne.s32.totalorder %s165, %s168
      %p174 = scmp.eq.s32.totalorder %s20, 0
      %p175 = por %p173, %p174
      %p176 = scmp.ne.s32.totalorder %s165, %s168
      %p177 = scmp.eq.s32.totalorder %s25, 5
      %p178 = por %p176, %p177
      %p179 = scmp.ne.s32.totalorder %s168, %s169
      %p180 = scmp.eq.s32.totalorder %s25, 0
      %p181 = por %p179, %p180
      %p182 = scmp.ne.s32.totalorder %s168, %s169
      %p183 = scmp.eq.s32.totalorder %s26, 5
      %p184 = por %p182, %p183
      %p186 = scmp.ne.s32.totalorder %s169, %s185
      %p187 = scmp.eq.s32.totalorder %s26, 0
      %p188 = por %p186, %p187
      %s189 = ssub.s32 %s27, %s39
      %p190 = scmp.eq.s32.totalorder %s189, 0
      %s192 = sadd.s32 %s191, 1
      %s193 = scalar_select %p190, %s191, %s192
      %p196 = pneg %p190
      %p197 = scmp.eq.s32.totalorder %s20, 5
      %p198 = por %p196, %p197
      %p199 = scmp.ne.s32.totalorder %s191, %s194
      %p200 = scmp.eq.s32.totalorder %s20, 0
      %p201 = por %p199, %p200
      %p202 = scmp.ne.s32.totalorder %s191, %s194
      %p203 = scmp.eq.s32.totalorder %s25, 5
      %p204 = por %p202, %p203
      %p205 = scmp.ne.s32.totalorder %s194, %s195
      %p206 = scmp.eq.s32.totalorder %s25, 0
      %p207 = por %p205, %p206
      %p208 = scmp.ne.s32.totalorder %s194, %s195
      %p209 = scmp.eq.s32.totalorder %s26, 5
      %p210 = por %p208, %p209
      %p212 = scmp.ne.s32.totalorder %s195, %s211
      %p213 = scmp.eq.s32.totalorder %s26, 0
      %p214 = por %p212, %p213
      %s215 = smul.u32 %s27, 3
      %s216 = sadd.s32 %s215, %s28
      %s217 = smul.u32 %s39, 3
      %s218 = sadd.s32 %s217, %s35
      %s219 = ssub.s32 %s216, %s218
      %p220 = scmp.eq.s32.totalorder %s219, 0
      %s222 = sadd.s32 %s221, 1
      %s223 = scalar_select %p220, %s221, %s222
      %p226 = pneg %p220
      %p227 = scmp.eq.s32.totalorder %s20, 5
      %p228 = por %p226, %p227
      %p229 = scmp.ne.s32.totalorder %s221, %s224
      %p230 = scmp.eq.s32.totalorder %s20, 0
      %p231 = por %p229, %p230
      %p232 = scmp.ne.s32.totalorder %s221, %s224
      %p233 = scmp.eq.s32.totalorder %s25, 5
      %p234 = por %p232, %p233
      %p235 = scmp.ne.s32.totalorder %s224, %s225
      %p236 = scmp.eq.s32.totalorder %s25, 0
      %p237 = por %p235, %p236
      %p238 = scmp.ne.s32.totalorder %s224, %s225
      %p239 = scmp.eq.s32.totalorder %s26, 5
      %p240 = por %p238, %p239
      %p242 = scmp.ne.s32.totalorder %s225, %s241
      %p243 = scmp.eq.s32.totalorder %s26, 0
      %p244 = por %p242, %p243
      %p245 = scmp.le.s32.totalorder 1, %s20
      %p246 = scmp.lt.s32.totalorder %s20, 7
      %p247 = pnand %p245, %p246
      %p248 = pneg %p247
      // Predicated region
      $region9: #{tpu_custom_call.1} parent=5 // pred_check
        _
      $region10: #{tpu_custom_call.1} parent=5 // pred_check_branch
        %250 = sbr.rel (%p247) target = $region12
      $region11: #{tpu_custom_call.1} parent=5 // pred_region
        %s251 = ssub.s32 %s20, 1
        // Predicated region
        $region13: #{tpu_custom_call.1} parent=11 // pred_check
          %p252 = pneg %p113
        $region14: #{tpu_custom_call.1} parent=11 // pred_check_branch
          %254 = sbr.rel (%p252) target = $region16
        $region15: #{tpu_custom_call.1} parent=11 // pred_region
          _
        $region16: #{tpu_custom_call.1} parent=11 // pred_fallthru
          _
        // Predicated region
        $region17: #{tpu_custom_call.1} parent=11 // pred_check
          %p255 = pneg %p134
        $region18: #{tpu_custom_call.1} parent=11 // pred_check_branch
          %257 = sbr.rel (%p255) target = $region20
        $region19: #{tpu_custom_call.1} parent=11 // pred_region
          _
        $region20: #{tpu_custom_call.1} parent=11 // pred_fallthru
          _
        // Predicated region
        $region21: #{tpu_custom_call.1} parent=11 // pred_check
          %p258 = pneg %p155
        $region22: #{tpu_custom_call.1} parent=11 // pred_check_branch
          %260 = sbr.rel (%p258) target = $region24
        $region23: #{tpu_custom_call.1} parent=11 // pred_region
          _
        $region24: #{tpu_custom_call.1} parent=11 // pred_fallthru
          _
      $region12: #{tpu_custom_call.1} parent=5 // pred_fallthru
        _
      %p261 = scmp.lt.s32.totalorder %s20, 6
      // Predicated region
      $region25: #{tpu_custom_call.1} parent=5 // pred_check
        %p262 = pneg %p261
      $region26: #{tpu_custom_call.1} parent=5 // pred_check_branch
        %264 = sbr.rel (%p262) target = $region28
      $region27: #{tpu_custom_call.1} parent=5 // pred_region
        // Predicated region
        $region29: #{tpu_custom_call.1} parent=27 // pred_check
          %p265 = pneg %p56
        $region30: #{tpu_custom_call.1} parent=27 // pred_check_branch
          %267 = sbr.rel (%p265) target = $region32
        $region31: #{tpu_custom_call.1} parent=27 // pred_region
          %s268 = smul.u32 %s27, 3
          %s269 = sadd.s32 %s268, %s28
          %s270 = smul.u32 16, %s269
          %p271 = scmp.lt.s32.totalorder %s270, 95
          %s272 = scalar_select %p271, %s270, 95
          %s273 = smul.addr %s272, 8
          %s274 = scalar_lea.vmem %s0, %s273
          %s275 = smul.u32 %s27, 3
          %s276 = sadd.s32 %s275, %s28
          %s277 = smul.u32 16, %s276
        $region32: #{tpu_custom_call.1} parent=27 // pred_fallthru
          _
        // Predicated region
        $region33: #{tpu_custom_call.1} parent=27 // pred_check
          %p278 = pneg %p86
        $region34: #{tpu_custom_call.1} parent=27 // pred_check_branch
          %280 = sbr.rel (%p278) target = $region36
        $region35: #{tpu_custom_call.1} parent=27 // pred_region
          %s281 = smul.u32 %s27, 3
          %s282 = sadd.s32 %s281, %s28
          %s283 = smul.u32 16, %s282
          %p284 = scmp.lt.s32.totalorder %s283, 95
          %s285 = scalar_select %p284, %s283, 95
          %s286 = smul.addr %s285, 8
          %s287 = scalar_lea.vmem %s1, %s286
          %s288 = smul.u32 %s27, 3
          %s289 = sadd.s32 %s288, %s28
          %s290 = smul.u32 16, %s289
        $region36: #{tpu_custom_call.1} parent=27 // pred_fallthru
          _
      $region28: #{tpu_custom_call.1} parent=5 // pred_fallthru
        _
      %p291 = scmp.le.s32.totalorder 1, %s20
      %p292 = scmp.lt.s32.totalorder %s20, 7
      %p293 = pnand %p291, %p292
      %p294 = pneg %p293
      // Predicated region
      $region37: #{tpu_custom_call.1} parent=5 // pred_check
        _
      $region38: #{tpu_custom_call.1} parent=5 // pred_check_branch
        %296 = sbr.rel (%p293) target = $region40
      $region39: #{tpu_custom_call.1} parent=5 // pred_region
        %s297 = ssub.s32 %s20, 1
        %s298 = smul.u32 %s29, 3
        %s299 = sadd.s32 %s298, %s30
        %s300 = smul.u32 16, %s299
        %p301 = scmp.lt.s32.totalorder %s300, 95
        %s302 = scalar_select %p301, %s300, 95
        %s303 = smul.addr %s302, 8
        %s304 = scalar_lea.vmem %s0, %s303
        %p305 = pneg %p62
        %p306 = pneg %p59
        %s307 = smul.u32 %s29, 3
        %s308 = sadd.s32 %s307, %s30
        %s309 = smul.u32 16, %s308
        %p310 = scmp.lt.s32.totalorder %s309, 95
        %s311 = scalar_select %p310, %s309, 95
        %s312 = smul.addr %s311, 8
        %s313 = scalar_lea.vmem %s1, %s312
        %p314 = pneg %p92
        %p315 = pneg %p89
        %p316 = pneg %p113
        %p317 = pneg %p110
        %p318 = pneg %p134
        %p319 = pneg %p131
        %p320 = pneg %p155
        %p321 = pneg %p152
        %p322 = pneg %p181
        %p323 = pneg %p178
        %s324 = sand.u32 %s168, 1
        %s325 = scalar_lea.sflag [#allocation3], %s324
        %s326 = sand.u32 %s168, 1
        %s327 = smul.addr %s326, 16
        %s328 = scalar_lea.vmem [#allocation2], %s327
        %p329 = pneg %p207
        %p330 = pneg %p204
        %s331 = sand.u32 %s25, 1
        %s332 = scalar_lea.sflag [#allocation5], %s331
        %s333 = sand.u32 %s194, 1
        %s334 = smul.addr %s333, 4
        %s335 = scalar_lea.vmem [#allocation4], %s334
        %p336 = pneg %p237
        %p337 = pneg %p234
        %s338 = sand.u32 %s25, 1
        %s339 = scalar_lea.sflag [#allocation5], %s338
        %s340 = sand.u32 %s224, 1
        %s341 = smul.addr %s340, 4
        %s342 = scalar_lea.vmem [#allocation6], %s341
        %s343 = smul.u32 %s29, 3
        %s344 = sadd.s32 %s343, %s30
        %s345 = smul.u32 16, %s344
        %p346 = scmp.lt.s32.totalorder %s345, 95
        %s347 = scalar_select %p346, %s345, 95
        %s348 = smul.addr %s347, 8
        %s349 = scalar_lea.vmem %s0, %s348
        %s350 = smul.u32 %s29, 3
        %s351 = sadd.s32 %s350, %s30
        %s352 = smul.u32 16, %s351
        %s353 = smul.u32 %s29, 3
        %s354 = sadd.s32 %s353, %s30
        %s355 = smul.u32 16, %s354
        %p356 = scmp.lt.s32.totalorder %s355, 95
        %s357 = scalar_select %p356, %s355, 95
        %s358 = smul.addr %s357, 8
        %s359 = scalar_lea.vmem %s1, %s358
        %s360 = smul.u32 %s29, 3
        %s361 = sadd.s32 %s360, %s30
        %s362 = smul.u32 16, %s361
        %s363 = smul.u32 %s29, 3
        %s364 = sadd.s32 %s363, %s30
        %p365 = scmp.eq.s32.totalorder %s30, 0
        // Predicated region
        $region41: #{tpu_custom_call.1} parent=39 // pred_check
          %p366 = pneg %p365
        $region42: #{tpu_custom_call.1} parent=39 // pred_check_branch
          %368 = sbr.rel (%p366) target = $region44
        $region43: #{tpu_custom_call.1} parent=39 // pred_region
          %vm369 = vcmask 261120
          %370 = vst.msk [vmem:[%s328] sm:$0xff] %vm369, 0.0
          %371 = vst.msk [vmem:[%s328 + $0x8] sm:$0xff] %vm369, 0.0
          %vm372 = vcmask 125952
          %373 = vst.msk [vmem:[%s335] sm:$0xf] %vm372, 0.0
        $region44: #{tpu_custom_call.1} parent=39 // pred_fallthru
          _
        %v374 = vld [vmem:[%s349] sm:$0xff]
        %v375 = vld [vmem:[%s349 + $0x8] sm:$0xff]
        %v376 = vld [vmem:[%s349 + $0x10] sm:$0xff]
        %v377 = vld [vmem:[%s349 + $0x18] sm:$0xff]
        %v378 = vld [vmem:[%s349 + $0x20] sm:$0xff]
        %v379 = vld [vmem:[%s349 + $0x28] sm:$0xff]
        %v380 = vld [vmem:[%s349 + $0x30] sm:$0xff]
        %v381 = vld [vmem:[%s349 + $0x38] sm:$0xff]
        %v382 = vld [vmem:[%s349 + $0x40] sm:$0xff]
        %v383 = vld [vmem:[%s349 + $0x48] sm:$0xff]
        %v384 = vld [vmem:[%s349 + $0x50] sm:$0xff]
        %v385 = vld [vmem:[%s349 + $0x58] sm:$0xff]
        %v386 = vld [vmem:[%s349 + $0x60] sm:$0xff]
        %v387 = vld [vmem:[%s349 + $0x68] sm:$0xff]
        %v388 = vld [vmem:[%s349 + $0x70] sm:$0xff]
        %v389 = vld [vmem:[%s349 + $0x78] sm:$0xff]
        %v390 = vlaneseq
        %v391 = vand.u32 %v390, 127
        %392 = vset.pattern.permute.xlu0 0
        %393 = vperm.xlu0 %392, %v374
        %v394 = vpop.permute.xlu0 %393
        %395 = vset.pattern.permute.xlu0 0
        %396 = vperm.xlu0 %395, %v375
        %v397 = vpop.permute.xlu0 %396
        %398 = vset.pattern.permute.xlu0 0
        %399 = vperm.xlu0 %398, %v376
        %v400 = vpop.permute.xlu0 %399
        %401 = vset.pattern.permute.xlu0 0
        %402 = vperm.xlu0 %401, %v377
        %v403 = vpop.permute.xlu0 %402
        %404 = vset.pattern.permute.xlu0 0
        %405 = vperm.xlu0 %404, %v378
        %v406 = vpop.permute.xlu0 %405
        %407 = vset.pattern.permute.xlu0 0
        %408 = vperm.xlu0 %407, %v379
        %v409 = vpop.permute.xlu0 %408
        %410 = vset.pattern.permute.xlu0 0
        %411 = vperm.xlu0 %410, %v380
        %v412 = vpop.permute.xlu0 %411
        %413 = vset.pattern.permute.xlu0 0
        %414 = vperm.xlu0 %413, %v381
        %v415 = vpop.permute.xlu0 %414
        %416 = vset.pattern.permute.xlu0 0
        %417 = vperm.xlu0 %416, %v382
        %v418 = vpop.permute.xlu0 %417
        %419 = vset.pattern.permute.xlu0 0
        %420 = vperm.xlu0 %419, %v383
        %v421 = vpop.permute.xlu0 %420
        %422 = vset.pattern.permute.xlu0 0
        %423 = vperm.xlu0 %422, %v384
        %v424 = vpop.permute.xlu0 %423
        %425 = vset.pattern.permute.xlu0 0
        %426 = vperm.xlu0 %425, %v385
        %v427 = vpop.permute.xlu0 %426
        %428 = vset.pattern.permute.xlu0 0
        %429 = vperm.xlu0 %428, %v386
        %v430 = vpop.permute.xlu0 %429
        %431 = vset.pattern.permute.xlu0 0
        %432 = vperm.xlu0 %431, %v387
        %v433 = vpop.permute.xlu0 %432
        %434 = vset.pattern.permute.xlu0 0
        %435 = vperm.xlu0 %434, %v388
        %v436 = vpop.permute.xlu0 %435
        %437 = vset.pattern.permute.xlu0 0
        %438 = vperm.xlu0 %437, %v389
        %v439 = vpop.permute.xlu0 %438
        %vm440 = vcmp.eq.s32.totalorder %v394, %v391
        %vm441 = vcmp.eq.s32.totalorder %v397, %v391
        %vm442 = vcmp.eq.s32.totalorder %v400, %v391
        %vm443 = vcmp.eq.s32.totalorder %v403, %v391
        %vm444 = vcmp.eq.s32.totalorder %v406, %v391
        %vm445 = vcmp.eq.s32.totalorder %v409, %v391
        %vm446 = vcmp.eq.s32.totalorder %v412, %v391
        %vm447 = vcmp.eq.s32.totalorder %v415, %v391
        %vm448 = vcmp.eq.s32.totalorder %v418, %v391
        %vm449 = vcmp.eq.s32.totalorder %v421, %v391
        %vm450 = vcmp.eq.s32.totalorder %v424, %v391
        %vm451 = vcmp.eq.s32.totalorder %v427, %v391
        %vm452 = vcmp.eq.s32.totalorder %v430, %v391
        %vm453 = vcmp.eq.s32.totalorder %v433, %v391
        %vm454 = vcmp.eq.s32.totalorder %v436, %v391
        %vm455 = vcmp.eq.s32.totalorder %v439, %v391
        %v456 = vsel %vm440, 1.0, 0.0
        %v457 = vsel %vm441, 1.0, 0.0
        %v458 = vsel %vm442, 1.0, 0.0
        %v459 = vsel %vm443, 1.0, 0.0
        %v460 = vsel %vm444, 1.0, 0.0
        %v461 = vsel %vm445, 1.0, 0.0
        %v462 = vsel %vm446, 1.0, 0.0
        %v463 = vsel %vm447, 1.0, 0.0
        %v464 = vsel %vm448, 1.0, 0.0
        %v465 = vsel %vm449, 1.0, 0.0
        %v466 = vsel %vm450, 1.0, 0.0
        %v467 = vsel %vm451, 1.0, 0.0
        %v468 = vsel %vm452, 1.0, 0.0
        %v469 = vsel %vm453, 1.0, 0.0
        %v470 = vsel %vm454, 1.0, 0.0
        %v471 = vsel %vm455, 1.0, 0.0
        %v472 = vld [vmem:[%s359] sm:$0xff]
        %v473 = vld [vmem:[%s359 + $0x8] sm:$0xff]
        %v474 = vld [vmem:[%s359 + $0x10] sm:$0xff]
        %v475 = vld [vmem:[%s359 + $0x18] sm:$0xff]
        %v476 = vld [vmem:[%s359 + $0x20] sm:$0xff]
        %v477 = vld [vmem:[%s359 + $0x28] sm:$0xff]
        %v478 = vld [vmem:[%s359 + $0x30] sm:$0xff]
        %v479 = vld [vmem:[%s359 + $0x38] sm:$0xff]
        %v480 = vld [vmem:[%s359 + $0x40] sm:$0xff]
        %v481 = vld [vmem:[%s359 + $0x48] sm:$0xff]
        %v482 = vld [vmem:[%s359 + $0x50] sm:$0xff]
        %v483 = vld [vmem:[%s359 + $0x58] sm:$0xff]
        %v484 = vld [vmem:[%s359 + $0x60] sm:$0xff]
        %v485 = vld [vmem:[%s359 + $0x68] sm:$0xff]
        %v486 = vld [vmem:[%s359 + $0x70] sm:$0xff]
        %v487 = vld [vmem:[%s359 + $0x78] sm:$0xff]
        %488 = vset.pattern.permute.xlu0 0
        %489 = vperm.xlu0 %488, %v472
        %v490 = vpop.permute.xlu0 %489
        %491 = vset.pattern.permute.xlu0 0
        %492 = vperm.xlu0 %491, %v473
        %v493 = vpop.permute.xlu0 %492
        %494 = vset.pattern.permute.xlu0 0
        %495 = vperm.xlu0 %494, %v474
        %v496 = vpop.permute.xlu0 %495
        %497 = vset.pattern.permute.xlu0 0
        %498 = vperm.xlu0 %497, %v475
        %v499 = vpop.permute.xlu0 %498
        %500 = vset.pattern.permute.xlu0 0
        %501 = vperm.xlu0 %500, %v476
        %v502 = vpop.permute.xlu0 %501
        %503 = vset.pattern.permute.xlu0 0
        %504 = vperm.xlu0 %503, %v477
        %v505 = vpop.permute.xlu0 %504
        %506 = vset.pattern.permute.xlu0 0
        %507 = vperm.xlu0 %506, %v478
        %v508 = vpop.permute.xlu0 %507
        %509 = vset.pattern.permute.xlu0 0
        %510 = vperm.xlu0 %509, %v479
        %v511 = vpop.permute.xlu0 %510
        %512 = vset.pattern.permute.xlu0 0
        %513 = vperm.xlu0 %512, %v480
        %v514 = vpop.permute.xlu0 %513
        %515 = vset.pattern.permute.xlu0 0
        %516 = vperm.xlu0 %515, %v481
        %v517 = vpop.permute.xlu0 %516
        %518 = vset.pattern.permute.xlu0 0
        %519 = vperm.xlu0 %518, %v482
        %v520 = vpop.permute.xlu0 %519
        %521 = vset.pattern.permute.xlu0 0
        %522 = vperm.xlu0 %521, %v483
        %v523 = vpop.permute.xlu0 %522
        %524 = vset.pattern.permute.xlu0 0
        %525 = vperm.xlu0 %524, %v484
        %v526 = vpop.permute.xlu0 %525
        %527 = vset.pattern.permute.xlu0 0
        %528 = vperm.xlu0 %527, %v485
        %v529 = vpop.permute.xlu0 %528
        %530 = vset.pattern.permute.xlu0 0
        %531 = vperm.xlu0 %530, %v486
        %v532 = vpop.permute.xlu0 %531
        %533 = vset.pattern.permute.xlu0 0
        %534 = vperm.xlu0 %533, %v487
        %v535 = vpop.permute.xlu0 %534
        %vm536 = vcmp.eq.s32.totalorder %v490, %v391
        %vm537 = vcmp.eq.s32.totalorder %v493, %v391
        %vm538 = vcmp.eq.s32.totalorder %v496, %v391
        %vm539 = vcmp.eq.s32.totalorder %v499, %v391
        %vm540 = vcmp.eq.s32.totalorder %v502, %v391
        %vm541 = vcmp.eq.s32.totalorder %v505, %v391
        %vm542 = vcmp.eq.s32.totalorder %v508, %v391
        %vm543 = vcmp.eq.s32.totalorder %v511, %v391
        %vm544 = vcmp.eq.s32.totalorder %v514, %v391
        %vm545 = vcmp.eq.s32.totalorder %v517, %v391
        %vm546 = vcmp.eq.s32.totalorder %v520, %v391
        %vm547 = vcmp.eq.s32.totalorder %v523, %v391
        %vm548 = vcmp.eq.s32.totalorder %v526, %v391
        %vm549 = vcmp.eq.s32.totalorder %v529, %v391
        %vm550 = vcmp.eq.s32.totalorder %v532, %v391
        %vm551 = vcmp.eq.s32.totalorder %v535, %v391
        %v552 = vsel %vm536, 1.0, 0.0
        %v553 = vsel %vm537, 1.0, 0.0
        %v554 = vsel %vm538, 1.0, 0.0
        %v555 = vsel %vm539, 1.0, 0.0
        %v556 = vsel %vm540, 1.0, 0.0
        %v557 = vsel %vm541, 1.0, 0.0
        %v558 = vsel %vm542, 1.0, 0.0
        %v559 = vsel %vm543, 1.0, 0.0
        %v560 = vsel %vm544, 1.0, 0.0
        %v561 = vsel %vm545, 1.0, 0.0
        %v562 = vsel %vm546, 1.0, 0.0
        %v563 = vsel %vm547, 1.0, 0.0
        %v564 = vsel %vm548, 1.0, 0.0
        %v565 = vsel %vm549, 1.0, 0.0
        %v566 = vsel %vm550, 1.0, 0.0
        %v567 = vsel %vm551, 1.0, 0.0
        %v568 = vld [vmem:[%s2] sm:$0xff]
        %v569 = vld [vmem:[%s2 + $0x8] sm:$0xff]
        %vm570 = vcmask 130048
        %v572 = vsel %vm570, %v456, 0
        %v575 = vsel %vm570, %v457, 0
        %v578 = vsel %vm570, %v458, 0
        %v581 = vsel %vm570, %v459, 0
        %v584 = vsel %vm570, %v460, 0
        %v587 = vsel %vm570, %v461, 0
        %v590 = vsel %vm570, %v462, 0
        %v593 = vsel %vm570, %v463, 0
        %v596 = vsel %vm570, %v464, 0
        %v599 = vsel %vm570, %v465, 0
        %v602 = vsel %vm570, %v466, 0
        %v605 = vsel %vm570, %v467, 0
        %v608 = vsel %vm570, %v468, 0
        %v611 = vsel %vm570, %v469, 0
        %v614 = vsel %vm570, %v470, 0
        %v617 = vsel %vm570, %v471, 0
        %619 = vmatprep.subr.mxu0 0.0
        %620 = vmatpush1.msra.mxu0 %v568
        %621 = vmatprep.subr.mxu0 0.0
        %622 = vmatpush1.msra.mxu0 %v569
        %623 = vmatprep.subr.mxu0 0.0
        %624 = vmatpush1.msra.mxu0 0.0
        %625 = vmatprep.subr.mxu0 0.0
        %626 = vmatpush1.msra.mxu0 0.0
        %627 = vmatprep.subr.mxu0 0.0
        %628 = vmatpush1.msra.mxu0 0.0
        %629 = vmatprep.subr.mxu0 0.0
        %630 = vmatpush1.msra.mxu0 0.0
        %631 = vmatprep.subr.mxu0 0.0
        %632 = vmatpush1.msra.mxu0 0.0
        %633 = vmatprep.subr.mxu0 0.0
        %634 = vmatpush1.msra.mxu0 0.0
        %635 = vmatprep.subr.mxu0 0.0
        %636 = vmatpush1.msra.mxu0 0.0
        %637 = vmatprep.subr.mxu0 0.0
        %638 = vmatpush1.msra.mxu0 0.0
        %639 = vmatprep.subr.mxu0 0.0
        %640 = vmatpush1.msra.mxu0 0.0
        %641 = vmatprep.subr.mxu0 0.0
        %642 = vmatpush1.msra.mxu0 0.0
        %643 = vmatprep.subr.mxu0 0.0
        %644 = vmatpush1.msra.mxu0 0.0
        %645 = vmatprep.subr.mxu0 0.0
        %646 = vmatpush1.msra.mxu0 0.0
        %647 = vmatprep.subr.mxu0 0.0
        %648 = vmatpush1.msra.mxu0 0.0
        %649 = vmatprep.subr.mxu0 0.0
        %650 = vmatpush1.msra.mxu0 0.0
        %651 = vmatprep.subr.mxu0 0.0
        %652 = vmatpush1.msra.mxu0 0.0
        %653 = vmatprep.subr.mxu0 0.0
        %654 = vmatpush1.msra.mxu0 0.0
        %655 = vmatprep.subr.mxu0 0.0
        %656 = vmatpush1.msra.mxu0 0.0
        %657 = vmatprep.subr.mxu0 0.0
        %658 = vmatpush1.msra.mxu0 0.0
        %659 = vmatprep.subr.mxu0 0.0
        %660 = vmatpush1.msra.mxu0 0.0
        %661 = vmatprep.subr.mxu0 0.0
        %662 = vmatpush1.msra.mxu0 0.0
        %663 = vmatprep.subr.mxu0 0.0
        %664 = vmatpush1.msra.mxu0 0.0
        %665 = vmatprep.subr.mxu0 0.0
        %666 = vmatpush1.msra.mxu0 0.0
        %667 = vmatprep.subr.mxu0 0.0
        %668 = vmatpush1.msra.mxu0 0.0
        %669 = vmatprep.subr.mxu0 0.0
        %670 = vmatpush1.msra.mxu0 0.0
        %671 = vmatprep.subr.mxu0 0.0
        %672 = vmatpush1.msra.mxu0 0.0
        %673 = vmatprep.subr.mxu0 0.0
        %674 = vmatpush1.msra.mxu0 0.0
        %675 = vmatprep.subr.mxu0 0.0
        %676 = vmatpush1.msra.mxu0 0.0
        %677 = vmatprep.subr.mxu0 0.0
        %678 = vmatpush1.msra.mxu0 0.0
        %679 = vmatprep.subr.mxu0 0.0
        %680 = vmatpush1.msra.mxu0 0.0
        %681 = vmatprep.subr.mxu0 0.0
        %682 = vmatpush1.msra.mxu0 0.0
        %683 = vmatprep.mubr.f32.mxu0 0.0
        %684 = vmatmul.mubr.f32.gmra.mrb[0].mxu0 %v572
        %v685 = vpop.f32.mrb[0].mxu0
        %v686 = vadd.f32 0.0, %v685
        %v687 = vpop.f32.mrb[0].mxu0
        %688 = vmatprep.mubr.f32.mxu0 0.0
        %689 = vmatmul.mubr.f32.gmra.mrb[0].mxu0 %v575
        %v690 = vpop.f32.mrb[0].mxu0
        %v691 = vadd.f32 0.0, %v690
        %v692 = vpop.f32.mrb[0].mxu0
        %693 = vmatprep.mubr.f32.mxu0 0.0
        %694 = vmatmul.mubr.f32.gmra.mrb[0].mxu0 %v578
        %v695 = vpop.f32.mrb[0].mxu0
        %v696 = vadd.f32 0.0, %v695
        %v697 = vpop.f32.mrb[0].mxu0
        %698 = vmatprep.mubr.f32.mxu0 0.0
        %699 = vmatmul.mubr.f32.gmra.mrb[0].mxu0 %v581
        %v700 = vpop.f32.mrb[0].mxu0
        %v701 = vadd.f32 0.0, %v700
        %v702 = vpop.f32.mrb[0].mxu0
        %703 = vmatprep.mubr.f32.mxu0 0.0
        %704 = vmatmul.mubr.f32.gmra.mrb[0].mxu0 %v584
        %v705 = vpop.f32.mrb[0].mxu0
        %v706 = vadd.f32 0.0, %v705
        %v707 = vpop.f32.mrb[0].mxu0
        %708 = vmatprep.mubr.f32.mxu0 0.0
        %709 = vmatmul.mubr.f32.gmra.mrb[0].mxu0 %v587
        %v710 = vpop.f32.mrb[0].mxu0
        %v711 = vadd.f32 0.0, %v710
        %v712 = vpop.f32.mrb[0].mxu0
        %713 = vmatprep.mubr.f32.mxu0 0.0
        %714 = vmatmul.mubr.f32.gmra.mrb[0].mxu0 %v590
        %v715 = vpop.f32.mrb[0].mxu0
        %v716 = vadd.f32 0.0, %v715
        %v717 = vpop.f32.mrb[0].mxu0
        %718 = vmatprep.mubr.f32.mxu0 0.0
        %719 = vmatmul.mubr.f32.gmra.mrb[0].mxu0 %v593
        %v720 = vpop.f32.mrb[0].mxu0
        %v721 = vadd.f32 0.0, %v720
        %v722 = vpop.f32.mrb[0].mxu0
        %723 = vmatprep.mubr.f32.mxu0 0.0
        %724 = vmatmul.mubr.f32.gmra.mrb[0].mxu0 %v596
        %v725 = vpop.f32.mrb[0].mxu0
        %v726 = vadd.f32 0.0, %v725
        %v727 = vpop.f32.mrb[0].mxu0
        %728 = vmatprep.mubr.f32.mxu0 0.0
        %729 = vmatmul.mubr.f32.gmra.mrb[0].mxu0 %v599
        %v730 = vpop.f32.mrb[0].mxu0
        %v731 = vadd.f32 0.0, %v730
        %v732 = vpop.f32.mrb[0].mxu0
        %733 = vmatprep.mubr.f32.mxu0 0.0
        %734 = vmatmul.mubr.f32.gmra.mrb[0].mxu0 %v602
        %v735 = vpop.f32.mrb[0].mxu0
        %v736 = vadd.f32 0.0, %v735
        %v737 = vpop.f32.mrb[0].mxu0
        %738 = vmatprep.mubr.f32.mxu0 0.0
        %739 = vmatmul.mubr.f32.gmra.mrb[0].mxu0 %v605
        %v740 = vpop.f32.mrb[0].mxu0
        %v741 = vadd.f32 0.0, %v740
        %v742 = vpop.f32.mrb[0].mxu0
        %743 = vmatprep.mubr.f32.mxu0 0.0
        %744 = vmatmul.mubr.f32.gmra.mrb[0].mxu0 %v608
        %v745 = vpop.f32.mrb[0].mxu0
        %v746 = vadd.f32 0.0, %v745
        %v747 = vpop.f32.mrb[0].mxu0
        %748 = vmatprep.mubr.f32.mxu0 0.0
        %749 = vmatmul.mubr.f32.gmra.mrb[0].mxu0 %v611
        %v750 = vpop.f32.mrb[0].mxu0
        %v751 = vadd.f32 0.0, %v750
        %v752 = vpop.f32.mrb[0].mxu0
        %753 = vmatprep.mubr.f32.mxu0 0.0
        %754 = vmatmul.mubr.f32.gmra.mrb[0].mxu0 %v614
        %v755 = vpop.f32.mrb[0].mxu0
        %v756 = vadd.f32 0.0, %v755
        %v757 = vpop.f32.mrb[0].mxu0
        %758 = vmatprep.mubr.f32.mxu0 0.0
        %759 = vmatmul.mubr.f32.gmra.mrb[0].mxu0 %v617
        %v760 = vpop.f32.mrb[0].mxu0
        %v761 = vadd.f32 0.0, %v760
        %v762 = vpop.f32.mrb[0].mxu0
        %763 = vdwg.mxu0
        %v764 = vld [vmem:[%s3] sm:$0xff]
        %v765 = vld [vmem:[%s3 + $0x8] sm:$0xff]
        %v767 = vsel %vm570, %v552, 0
        %v770 = vsel %vm570, %v553, 0
        %v773 = vsel %vm570, %v554, 0
        %v776 = vsel %vm570, %v555, 0
        %v779 = vsel %vm570, %v556, 0
        %v782 = vsel %vm570, %v557, 0
        %v785 = vsel %vm570, %v558, 0
        %v788 = vsel %vm570, %v559, 0
        %v791 = vsel %vm570, %v560, 0
        %v794 = vsel %vm570, %v561, 0
        %v797 = vsel %vm570, %v562, 0
        %v800 = vsel %vm570, %v563, 0
        %v803 = vsel %vm570, %v564, 0
        %v806 = vsel %vm570, %v565, 0
        %v809 = vsel %vm570, %v566, 0
        %v812 = vsel %vm570, %v567, 0
        %814 = vmatprep.subr.mxu0 0.0
        %815 = vmatpush1.msra.mxu0 %v764
        %816 = vmatprep.subr.mxu0 0.0
        %817 = vmatpush1.msra.mxu0 %v765
        %818 = vmatprep.subr.mxu0 0.0
        %819 = vmatpush1.msra.mxu0 0.0
        %820 = vmatprep.subr.mxu0 0.0
        %821 = vmatpush1.msra.mxu0 0.0
        %822 = vmatprep.subr.mxu0 0.0
        %823 = vmatpush1.msra.mxu0 0.0
        %824 = vmatprep.subr.mxu0 0.0
        %825 = vmatpush1.msra.mxu0 0.0
        %826 = vmatprep.subr.mxu0 0.0
        %827 = vmatpush1.msra.mxu0 0.0
        %828 = vmatprep.subr.mxu0 0.0
        %829 = vmatpush1.msra.mxu0 0.0
        %830 = vmatprep.subr.mxu0 0.0
        %831 = vmatpush1.msra.mxu0 0.0
        %832 = vmatprep.subr.mxu0 0.0
        %833 = vmatpush1.msra.mxu0 0.0
        %834 = vmatprep.subr.mxu0 0.0
        %835 = vmatpush1.msra.mxu0 0.0
        %836 = vmatprep.subr.mxu0 0.0
        %837 = vmatpush1.msra.mxu0 0.0
        %838 = vmatprep.subr.mxu0 0.0
        %839 = vmatpush1.msra.mxu0 0.0
        %840 = vmatprep.subr.mxu0 0.0
        %841 = vmatpush1.msra.mxu0 0.0
        %842 = vmatprep.subr.mxu0 0.0
        %843 = vmatpush1.msra.mxu0 0.0
        %844 = vmatprep.subr.mxu0 0.0
        %845 = vmatpush1.msra.mxu0 0.0
        %846 = vmatprep.subr.mxu0 0.0
        %847 = vmatpush1.msra.mxu0 0.0
        %848 = vmatprep.subr.mxu0 0.0
        %849 = vmatpush1.msra.mxu0 0.0
        %850 = vmatprep.subr.mxu0 0.0
        %851 = vmatpush1.msra.mxu0 0.0
        %852 = vmatprep.subr.mxu0 0.0
        %853 = vmatpush1.msra.mxu0 0.0
        %854 = vmatprep.subr.mxu0 0.0
        %855 = vmatpush1.msra.mxu0 0.0
        %856 = vmatprep.subr.mxu0 0.0
        %857 = vmatpush1.msra.mxu0 0.0
        %858 = vmatprep.subr.mxu0 0.0
        %859 = vmatpush1.msra.mxu0 0.0
        %860 = vmatprep.subr.mxu0 0.0
        %861 = vmatpush1.msra.mxu0 0.0
        %862 = vmatprep.subr.mxu0 0.0
        %863 = vmatpush1.msra.mxu0 0.0
        %864 = vmatprep.subr.mxu0 0.0
        %865 = vmatpush1.msra.mxu0 0.0
        %866 = vmatprep.subr.mxu0 0.0
        %867 = vmatpush1.msra.mxu0 0.0
        %868 = vmatprep.subr.mxu0 0.0
        %869 = vmatpush1.msra.mxu0 0.0
        %870 = vmatprep.subr.mxu0 0.0
        %871 = vmatpush1.msra.mxu0 0.0
        %872 = vmatprep.subr.mxu0 0.0
        %873 = vmatpush1.msra.mxu0 0.0
        %874 = vmatprep.subr.mxu0 0.0
        %875 = vmatpush1.msra.mxu0 0.0
        %876 = vmatprep.subr.mxu0 0.0
        %877 = vmatpush1.msra.mxu0 0.0
        %878 = vmatprep.mubr.f32.mxu0 0.0
        %879 = vmatmul.mubr.f32.gmra.mrb[0].mxu0 %v767
        %v880 = vpop.f32.mrb[0].mxu0
        %v881 = vadd.f32 0.0, %v880
        %v882 = vpop.f32.mrb[0].mxu0
        %883 = vmatprep.mubr.f32.mxu0 0.0
        %884 = vmatmul.mubr.f32.gmra.mrb[0].mxu0 %v770
        %v885 = vpop.f32.mrb[0].mxu0
        %v886 = vadd.f32 0.0, %v885
        %v887 = vpop.f32.mrb[0].mxu0
        %888 = vmatprep.mubr.f32.mxu0 0.0
        %889 = vmatmul.mubr.f32.gmra.mrb[0].mxu0 %v773
        %v890 = vpop.f32.mrb[0].mxu0
        %v891 = vadd.f32 0.0, %v890
        %v892 = vpop.f32.mrb[0].mxu0
        %893 = vmatprep.mubr.f32.mxu0 0.0
        %894 = vmatmul.mubr.f32.gmra.mrb[0].mxu0 %v776
        %v895 = vpop.f32.mrb[0].mxu0
        %v896 = vadd.f32 0.0, %v895
        %v897 = vpop.f32.mrb[0].mxu0
        %898 = vmatprep.mubr.f32.mxu0 0.0
        %899 = vmatmul.mubr.f32.gmra.mrb[0].mxu0 %v779
        %v900 = vpop.f32.mrb[0].mxu0
        %v901 = vadd.f32 0.0, %v900
        %v902 = vpop.f32.mrb[0].mxu0
        %903 = vmatprep.mubr.f32.mxu0 0.0
        %904 = vmatmul.mubr.f32.gmra.mrb[0].mxu0 %v782
        %v905 = vpop.f32.mrb[0].mxu0
        %v906 = vadd.f32 0.0, %v905
        %v907 = vpop.f32.mrb[0].mxu0
        %908 = vmatprep.mubr.f32.mxu0 0.0
        %909 = vmatmul.mubr.f32.gmra.mrb[0].mxu0 %v785
        %v910 = vpop.f32.mrb[0].mxu0
        %v911 = vadd.f32 0.0, %v910
        %v912 = vpop.f32.mrb[0].mxu0
        %913 = vmatprep.mubr.f32.mxu0 0.0
        %914 = vmatmul.mubr.f32.gmra.mrb[0].mxu0 %v788
        %v915 = vpop.f32.mrb[0].mxu0
        %v916 = vadd.f32 0.0, %v915
        %v917 = vpop.f32.mrb[0].mxu0
        %918 = vmatprep.mubr.f32.mxu0 0.0
        %919 = vmatmul.mubr.f32.gmra.mrb[0].mxu0 %v791
        %v920 = vpop.f32.mrb[0].mxu0
        %v921 = vadd.f32 0.0, %v920
        %v922 = vpop.f32.mrb[0].mxu0
        %923 = vmatprep.mubr.f32.mxu0 0.0
        %924 = vmatmul.mubr.f32.gmra.mrb[0].mxu0 %v794
        %v925 = vpop.f32.mrb[0].mxu0
        %v926 = vadd.f32 0.0, %v925
        %v927 = vpop.f32.mrb[0].mxu0
        %928 = vmatprep.mubr.f32.mxu0 0.0
        %929 = vmatmul.mubr.f32.gmra.mrb[0].mxu0 %v797
        %v930 = vpop.f32.mrb[0].mxu0
        %v931 = vadd.f32 0.0, %v930
        %v932 = vpop.f32.mrb[0].mxu0
        %933 = vmatprep.mubr.f32.mxu0 0.0
        %934 = vmatmul.mubr.f32.gmra.mrb[0].mxu0 %v800
        %v935 = vpop.f32.mrb[0].mxu0
        %v936 = vadd.f32 0.0, %v935
        %v937 = vpop.f32.mrb[0].mxu0
        %938 = vmatprep.mubr.f32.mxu0 0.0
        %939 = vmatmul.mubr.f32.gmra.mrb[0].mxu0 %v803
        %v940 = vpop.f32.mrb[0].mxu0
        %v941 = vadd.f32 0.0, %v940
        %v942 = vpop.f32.mrb[0].mxu0
        %943 = vmatprep.mubr.f32.mxu0 0.0
        %944 = vmatmul.mubr.f32.gmra.mrb[0].mxu0 %v806
        %v945 = vpop.f32.mrb[0].mxu0
        %v946 = vadd.f32 0.0, %v945
        %v947 = vpop.f32.mrb[0].mxu0
        %948 = vmatprep.mubr.f32.mxu0 0.0
        %949 = vmatmul.mubr.f32.gmra.mrb[0].mxu0 %v809
        %v950 = vpop.f32.mrb[0].mxu0
        %v951 = vadd.f32 0.0, %v950
        %v952 = vpop.f32.mrb[0].mxu0
        %953 = vmatprep.mubr.f32.mxu0 0.0
        %954 = vmatmul.mubr.f32.gmra.mrb[0].mxu0 %v812
        %v955 = vpop.f32.mrb[0].mxu0
        %v956 = vadd.f32 0.0, %v955
        %v957 = vpop.f32.mrb[0].mxu0
        %958 = vdwg.mxu0
        %v959 = vld [vmem:[%s4] sm:$0xff]
        %v960 = vld [vmem:[%s4 + $0x8] sm:$0xff]
        %v961 = vld [vmem:[%s4 + $0x10] sm:$0xff]
        %v962 = vld [vmem:[%s4 + $0x18] sm:$0xff]
        %v963 = vmul.f32 %v686, %v881
        %v964 = vmul.f32 %v691, %v886
        %v965 = vmul.f32 %v696, %v891
        %v966 = vmul.f32 %v701, %v896
        %v967 = vmul.f32 %v706, %v901
        %v968 = vmul.f32 %v711, %v906
        %v969 = vmul.f32 %v716, %v911
        %v970 = vmul.f32 %v721, %v916
        %v971 = vmul.f32 %v726, %v921
        %v972 = vmul.f32 %v731, %v926
        %v973 = vmul.f32 %v736, %v931
        %v974 = vmul.f32 %v741, %v936
        %v975 = vmul.f32 %v746, %v941
        %v976 = vmul.f32 %v751, %v946
        %v977 = vmul.f32 %v756, %v951
        %v978 = vmul.f32 %v761, %v956
        %979 = vxpose.xlu0.b32.start [1/16] %v959, 128
        %980 = vxpose.xlu0.b32.cont [2/16] %v960, 128
        %981 = vxpose.xlu0.b32.cont [3/16] %v961, 128
        %982 = vxpose.xlu0.b32.cont [4/16] %v962, 128
        %983 = vxpose.xlu0.b32.cont [5/16] 0.0, 128
        %984 = vxpose.xlu0.b32.cont [6/16] 0.0, 128
        %985 = vxpose.xlu0.b32.cont [7/16] 0.0, 128
        %986 = vxpose.xlu0.b32.cont [8/16] 0.0, 128
        %987 = vxpose.xlu0.b32.cont [9/16] 0.0, 128
        %988 = vxpose.xlu0.b32.cont [10/16] 0.0, 128
        %989 = vxpose.xlu0.b32.cont [11/16] 0.0, 128
        %990 = vxpose.xlu0.b32.cont [12/16] 0.0, 128
        %991 = vxpose.xlu0.b32.cont [13/16] 0.0, 128
        %992 = vxpose.xlu0.b32.cont [14/16] 0.0, 128
        %993 = vxpose.xlu0.b32.cont [15/16] 0.0, 128
        %994 = vxpose.xlu0.b32.end [16/16] 0.0, 128
        %v995 = vpop.trf.xlu0
        %v996 = vpop.trf.xlu0
        %v997 = vpop.trf.xlu0
        %v998 = vpop.trf.xlu0
        %v999 = vpop.trf.xlu0
        %v1000 = vpop.trf.xlu0
        %v1001 = vpop.trf.xlu0
        %v1002 = vpop.trf.xlu0
        %v1003 = vpop.trf.xlu0
        %v1004 = vpop.trf.xlu0
        %v1005 = vpop.trf.xlu0
        %v1006 = vpop.trf.xlu0
        %v1007 = vpop.trf.xlu0
        %v1008 = vpop.trf.xlu0
        %v1009 = vpop.trf.xlu0
        %v1010 = vpop.trf.xlu0
        %vm1011 = vcmask 261120
        %v1013 = vsel %vm1011, %v995, 0
        %v1016 = vsel %vm1011, %v963, 0
        %v1019 = vsel %vm1011, %v964, 0
        %v1022 = vsel %vm1011, %v965, 0
        %v1025 = vsel %vm1011, %v966, 0
        %v1028 = vsel %vm1011, %v967, 0
        %v1031 = vsel %vm1011, %v968, 0
        %v1034 = vsel %vm1011, %v969, 0
        %v1037 = vsel %vm1011, %v970, 0
        %v1040 = vsel %vm1011, %v971, 0
        %v1043 = vsel %vm1011, %v972, 0
        %v1046 = vsel %vm1011, %v973, 0
        %v1049 = vsel %vm1011, %v974, 0
        %v1052 = vsel %vm1011, %v975, 0
        %v1055 = vsel %vm1011, %v976, 0
        %v1058 = vsel %vm1011, %v977, 0
        %v1061 = vsel %vm1011, %v978, 0
        %1063 = vmatprep.subr.mxu0 0.0
        %1064 = vmatpush1.xpose.msra.mxu0 %v1016
        %1065 = vmatprep.subr.mxu0 0.0
        %1066 = vmatpush1.xpose.msra.mxu0 %v1019
        %1067 = vmatprep.subr.mxu0 0.0
        %1068 = vmatpush1.xpose.msra.mxu0 %v1022
        %1069 = vmatprep.subr.mxu0 0.0
        %1070 = vmatpush1.xpose.msra.mxu0 %v1025
        %1071 = vmatprep.subr.mxu0 0.0
        %1072 = vmatpush1.xpose.msra.mxu0 %v1028
        %1073 = vmatprep.subr.mxu0 0.0
        %1074 = vmatpush1.xpose.msra.mxu0 %v1031
        %1075 = vmatprep.subr.mxu0 0.0
        %1076 = vmatpush1.xpose.msra.mxu0 %v1034
        %1077 = vmatprep.subr.mxu0 0.0
        %1078 = vmatpush1.xpose.msra.mxu0 %v1037
        %1079 = vmatprep.subr.mxu0 0.0
        %1080 = vmatpush1.xpose.msra.mxu0 %v1040
        %1081 = vmatprep.subr.mxu0 0.0
        %1082 = vmatpush1.xpose.msra.mxu0 %v1043
        %1083 = vmatprep.subr.mxu0 0.0
        %1084 = vmatpush1.xpose.msra.mxu0 %v1046
        %1085 = vmatprep.subr.mxu0 0.0
        %1086 = vmatpush1.xpose.msra.mxu0 %v1049
        %1087 = vmatprep.subr.mxu0 0.0
        %1088 = vmatpush1.xpose.msra.mxu0 %v1052
        %1089 = vmatprep.subr.mxu0 0.0
        %1090 = vmatpush1.xpose.msra.mxu0 %v1055
        %1091 = vmatprep.subr.mxu0 0.0
        %1092 = vmatpush1.xpose.msra.mxu0 %v1058
        %1093 = vmatprep.subr.mxu0 0.0
        %1094 = vmatpush1.xpose.msra.mxu0 %v1061
        %1095 = vmatprep.subr.mxu0 0.0
        %1096 = vmatpush1.xpose.msra.mxu0 0.0
        %1097 = vmatprep.subr.mxu0 0.0
        %1098 = vmatpush1.xpose.msra.mxu0 0.0
        %1099 = vmatprep.subr.mxu0 0.0
        %1100 = vmatpush1.xpose.msra.mxu0 0.0
        %1101 = vmatprep.subr.mxu0 0.0
        %1102 = vmatpush1.xpose.msra.mxu0 0.0
        %1103 = vmatprep.subr.mxu0 0.0
        %1104 = vmatpush1.xpose.msra.mxu0 0.0
        %1105 = vmatprep.subr.mxu0 0.0
        %1106 = vmatpush1.xpose.msra.mxu0 0.0
        %1107 = vmatprep.subr.mxu0 0.0
        %1108 = vmatpush1.xpose.msra.mxu0 0.0
        %1109 = vmatprep.subr.mxu0 0.0
        %1110 = vmatpush1.xpose.msra.mxu0 0.0
        %1111 = vmatprep.subr.mxu0 0.0
        %1112 = vmatpush1.xpose.msra.mxu0 0.0
        %1113 = vmatprep.subr.mxu0 0.0
        %1114 = vmatpush1.xpose.msra.mxu0 0.0
        %1115 = vmatprep.subr.mxu0 0.0
        %1116 = vmatpush1.xpose.msra.mxu0 0.0
        %1117 = vmatprep.subr.mxu0 0.0
        %1118 = vmatpush1.xpose.msra.mxu0 0.0
        %1119 = vmatprep.subr.mxu0 0.0
        %1120 = vmatpush1.xpose.msra.mxu0 0.0
        %1121 = vmatprep.subr.mxu0 0.0
        %1122 = vmatpush1.xpose.msra.mxu0 0.0
        %1123 = vmatprep.subr.mxu0 0.0
        %1124 = vmatpush1.xpose.msra.mxu0 0.0
        %1125 = vmatprep.subr.mxu0 0.0
        %1126 = vmatpush1.xpose.msra.mxu0 0.0
        %1127 = vmatprep.mubr.f32.mxu0 0.0
        %1128 = vmatmul.mubr.f32.gmra.mrb[0].mxu0 %v1013
        %v1129 = vpop.f32.mrb[0].mxu0
        %v1130 = vadd.f32 0.0, %v1129
        %v1131 = vpop.f32.mrb[0].mxu0
        %1132 = vdwg.mxu0
        %v1133 = vmax.f32 %v1130, -10.0
        %v1134 = vmin.f32 %v1133, 10.0
        %v1135 = vmul.f32 %v1134, 1.442695
        %v1136 = vpow.pop %v1135
        %s1137 = smul.u32 %s29, 3
        %s1138 = sadd.s32 %s1137, %s30
        %s1139 = smul.u32 %s1138, 128
        %v1140 = vstv %s1139
        %v1141 = vadd.s32 %v1140, %v391
        %vm1142 = vcmp.lt.s32.totalorder %v1141, 608
        %v1143 = vsel %vm1142, %v1136, 0.0
        %1144 = vst [vmem:[%s342] sm:$0xf] %v1143
        %v1145 = vld [vmem:[%s335] sm:$0xf]
        %1146 = vmatprep.subr.mxu0 0.0
        %1147 = vmatpush1.msra.mxu0 %v456
        %1148 = vmatprep.subr.mxu0 0.0
        %1149 = vmatpush1.msra.mxu0 %v457
        %1150 = vmatprep.subr.mxu0 0.0
        %1151 = vmatpush1.msra.mxu0 %v458
        %1152 = vmatprep.subr.mxu0 0.0
        %1153 = vmatpush1.msra.mxu0 %v459
        %1154 = vmatprep.subr.mxu0 0.0
        %1155 = vmatpush1.msra.mxu0 %v460
        %1156 = vmatprep.subr.mxu0 0.0
        %1157 = vmatpush1.msra.mxu0 %v461
        %1158 = vmatprep.subr.mxu0 0.0
        %1159 = vmatpush1.msra.mxu0 %v462
        %1160 = vmatprep.subr.mxu0 0.0
        %1161 = vmatpush1.msra.mxu0 %v463
        %1162 = vmatprep.subr.mxu0 0.0
        %1163 = vmatpush1.msra.mxu0 %v464
        %1164 = vmatprep.subr.mxu0 0.0
        %1165 = vmatpush1.msra.mxu0 %v465
        %1166 = vmatprep.subr.mxu0 0.0
        %1167 = vmatpush1.msra.mxu0 %v466
        %1168 = vmatprep.subr.mxu0 0.0
        %1169 = vmatpush1.msra.mxu0 %v467
        %1170 = vmatprep.subr.mxu0 0.0
        %1171 = vmatpush1.msra.mxu0 %v468
        %1172 = vmatprep.subr.mxu0 0.0
        %1173 = vmatpush1.msra.mxu0 %v469
        %1174 = vmatprep.subr.mxu0 0.0
        %1175 = vmatpush1.msra.mxu0 %v470
        %1176 = vmatprep.subr.mxu0 0.0
        %1177 = vmatpush1.msra.mxu0 %v471
        %1178 = vmatprep.subr.mxu0 0.0
        %1179 = vmatpush1.msra.mxu0 0.0
        %1180 = vmatprep.subr.mxu0 0.0
        %1181 = vmatpush1.msra.mxu0 0.0
        %1182 = vmatprep.subr.mxu0 0.0
        %1183 = vmatpush1.msra.mxu0 0.0
        %1184 = vmatprep.subr.mxu0 0.0
        %1185 = vmatpush1.msra.mxu0 0.0
        %1186 = vmatprep.subr.mxu0 0.0
        %1187 = vmatpush1.msra.mxu0 0.0
        %1188 = vmatprep.subr.mxu0 0.0
        %1189 = vmatpush1.msra.mxu0 0.0
        %1190 = vmatprep.subr.mxu0 0.0
        %1191 = vmatpush1.msra.mxu0 0.0
        %1192 = vmatprep.subr.mxu0 0.0
        %1193 = vmatpush1.msra.mxu0 0.0
        %1194 = vmatprep.subr.mxu0 0.0
        %1195 = vmatpush1.msra.mxu0 0.0
        %1196 = vmatprep.subr.mxu0 0.0
        %1197 = vmatpush1.msra.mxu0 0.0
        %1198 = vmatprep.subr.mxu0 0.0
        %1199 = vmatpush1.msra.mxu0 0.0
        %1200 = vmatprep.subr.mxu0 0.0
        %1201 = vmatpush1.msra.mxu0 0.0
        %1202 = vmatprep.subr.mxu0 0.0
        %1203 = vmatpush1.msra.mxu0 0.0
        %1204 = vmatprep.subr.mxu0 0.0
        %1205 = vmatpush1.msra.mxu0 0.0
        %1206 = vmatprep.subr.mxu0 0.0
        %1207 = vmatpush1.msra.mxu0 0.0
        %1208 = vmatprep.subr.mxu0 0.0
        %1209 = vmatpush1.msra.mxu0 0.0
        %1210 = vmatprep.mubr.f32.mxu0 0.0
        %1211 = vmatmul.mubr.f32.gmra.mrb[0].mxu0 %v1143
        %v1212 = vpop.f32.mrb[0].mxu0
        %v1213 = vadd.f32 0.0, %v1212
        %v1214 = vpop.f32.mrb[0].mxu0
        %1215 = vdwg.mxu0
        %v1216 = vadd.f32 %v1145, %v1213
        %vm1217 = vcmask 125952
        %1218 = vst.msk [vmem:[%s335] sm:$0xf] %vm1217, %v1216
        %1219 = vxpose.xlu0.b32.start [1/16] %v1143, 128
        %1220 = vxpose.xlu0.b32.cont [2/16] 0.0, 128
        %1221 = vxpose.xlu0.b32.cont [3/16] 0.0, 128
        %1222 = vxpose.xlu0.b32.cont [4/16] 0.0, 128
        %1223 = vxpose.xlu0.b32.cont [5/16] 0.0, 128
        %1224 = vxpose.xlu0.b32.cont [6/16] 0.0, 128
        %1225 = vxpose.xlu0.b32.cont [7/16] 0.0, 128
        %1226 = vxpose.xlu0.b32.cont [8/16] 0.0, 128
        %1227 = vxpose.xlu0.b32.cont [9/16] 0.0, 128
        %1228 = vxpose.xlu0.b32.cont [10/16] 0.0, 128
        %1229 = vxpose.xlu0.b32.cont [11/16] 0.0, 128
        %1230 = vxpose.xlu0.b32.cont [12/16] 0.0, 128
        %1231 = vxpose.xlu0.b32.cont [13/16] 0.0, 128
        %1232 = vxpose.xlu0.b32.cont [14/16] 0.0, 128
        %1233 = vxpose.xlu0.b32.cont [15/16] 0.0, 128
        %1234 = vxpose.xlu0.b32.end [16/16] 0.0, 128
        %v1235 = vpop.trf.xlu0
        %v1236 = vpop.trf.xlu0
        %v1237 = vpop.trf.xlu0
        %v1238 = vpop.trf.xlu0
        %v1239 = vpop.trf.xlu0
        %v1240 = vpop.trf.xlu0
        %v1241 = vpop.trf.xlu0
        %v1242 = vpop.trf.xlu0
        %v1243 = vpop.trf.xlu0
        %v1244 = vpop.trf.xlu0
        %v1245 = vpop.trf.xlu0
        %v1246 = vpop.trf.xlu0
        %v1247 = vpop.trf.xlu0
        %v1248 = vpop.trf.xlu0
        %v1249 = vpop.trf.xlu0
        %v1250 = vpop.trf.xlu0
        %vm1251 = vcmask 31744
        %v1253 = vsel %vm1251, %v1235, 0
        %v1256 = vsel %vm1251, %v1236, 0
        %v1259 = vsel %vm1251, %v1237, 0
        %v1262 = vsel %vm1251, %v1238, 0
        %v1265 = vsel %vm1251, %v1239, 0
        %v1268 = vsel %vm1251, %v1240, 0
        %v1271 = vsel %vm1251, %v1241, 0
        %v1274 = vsel %vm1251, %v1242, 0
        %v1277 = vsel %vm1251, %v1243, 0
        %v1280 = vsel %vm1251, %v1244, 0
        %v1283 = vsel %vm1251, %v1245, 0
        %v1286 = vsel %vm1251, %v1246, 0
        %v1289 = vsel %vm1251, %v1247, 0
        %v1292 = vsel %vm1251, %v1248, 0
        %v1295 = vsel %vm1251, %v1249, 0
        %v1298 = vsel %vm1251, %v1250, 0
        %v1301 = vsel %vm1251, %v959, 0
        %v1304 = vsel %vm1251, %v960, 0
        %v1307 = vsel %vm1251, %v961, 0
        %v1310 = vsel %vm1251, %v962, 0
        %1312 = vmatprep.subr.mxu0 0.0
        %1313 = vmatpush1.xpose.msra.mxu0 %v1301
        %1314 = vmatprep.subr.mxu0 0.0
        %1315 = vmatpush1.xpose.msra.mxu0 %v1304
        %1316 = vmatprep.subr.mxu0 0.0
        %1317 = vmatpush1.xpose.msra.mxu0 %v1307
        %1318 = vmatprep.subr.mxu0 0.0
        %1319 = vmatpush1.xpose.msra.mxu0 %v1310
        %1320 = vmatprep.subr.mxu0 0.0
        %1321 = vmatpush1.xpose.msra.mxu0 0.0
        %1322 = vmatprep.subr.mxu0 0.0
        %1323 = vmatpush1.xpose.msra.mxu0 0.0
        %1324 = vmatprep.subr.mxu0 0.0
        %1325 = vmatpush1.xpose.msra.mxu0 0.0
        %1326 = vmatprep.subr.mxu0 0.0
        %1327 = vmatpush1.xpose.msra.mxu0 0.0
        %1328 = vmatprep.subr.mxu0 0.0
        %1329 = vmatpush1.xpose.msra.mxu0 0.0
        %1330 = vmatprep.subr.mxu0 0.0
        %1331 = vmatpush1.xpose.msra.mxu0 0.0
        %1332 = vmatprep.subr.mxu0 0.0
        %1333 = vmatpush1.xpose.msra.mxu0 0.0
        %1334 = vmatprep.subr.mxu0 0.0
        %1335 = vmatpush1.xpose.msra.mxu0 0.0
        %1336 = vmatprep.subr.mxu0 0.0
        %1337 = vmatpush1.xpose.msra.mxu0 0.0
        %1338 = vmatprep.subr.mxu0 0.0
        %1339 = vmatpush1.xpose.msra.mxu0 0.0
        %1340 = vmatprep.subr.mxu0 0.0
        %1341 = vmatpush1.xpose.msra.mxu0 0.0
        %1342 = vmatprep.subr.mxu0 0.0
        %1343 = vmatpush1.xpose.msra.mxu0 0.0
        %1344 = vmatprep.subr.mxu0 0.0
        %1345 = vmatpush1.xpose.msra.mxu0 0.0
        %1346 = vmatprep.subr.mxu0 0.0
        %1347 = vmatpush1.xpose.msra.mxu0 0.0
        %1348 = vmatprep.subr.mxu0 0.0
        %1349 = vmatpush1.xpose.msra.mxu0 0.0
        %1350 = vmatprep.subr.mxu0 0.0
        %1351 = vmatpush1.xpose.msra.mxu0 0.0
        %1352 = vmatprep.subr.mxu0 0.0
        %1353 = vmatpush1.xpose.msra.mxu0 0.0
        %1354 = vmatprep.subr.mxu0 0.0
        %1355 = vmatpush1.xpose.msra.mxu0 0.0
        %1356 = vmatprep.subr.mxu0 0.0
        %1357 = vmatpush1.xpose.msra.mxu0 0.0
        %1358 = vmatprep.subr.mxu0 0.0
        %1359 = vmatpush1.xpose.msra.mxu0 0.0
        %1360 = vmatprep.subr.mxu0 0.0
        %1361 = vmatpush1.xpose.msra.mxu0 0.0
        %1362 = vmatprep.subr.mxu0 0.0
        %1363 = vmatpush1.xpose.msra.mxu0 0.0
        %1364 = vmatprep.subr.mxu0 0.0
        %1365 = vmatpush1.xpose.msra.mxu0 0.0
        %1366 = vmatprep.subr.mxu0 0.0
        %1367 = vmatpush1.xpose.msra.mxu0 0.0
        %1368 = vmatprep.subr.mxu0 0.0
        %1369 = vmatpush1.xpose.msra.mxu0 0.0
        %1370 = vmatprep.subr.mxu0 0.0
        %1371 = vmatpush1.xpose.msra.mxu0 0.0
        %1372 = vmatprep.subr.mxu0 0.0
        %1373 = vmatpush1.xpose.msra.mxu0 0.0
        %1374 = vmatprep.subr.mxu0 0.0
        %1375 = vmatpush1.xpose.msra.mxu0 0.0
        %1376 = vmatprep.mubr.f32.mxu0 0.0
        %1377 = vmatmul.mubr.f32.gmra.mrb[0].mxu0 %v1253
        %v1378 = vpop.f32.mrb[0].mxu0
        %v1379 = vadd.f32 0.0, %v1378
        %v1380 = vpop.f32.mrb[0].mxu0
        %1381 = vmatprep.mubr.f32.mxu0 0.0
        %1382 = vmatmul.mubr.f32.gmra.mrb[0].mxu0 %v1256
        %v1383 = vpop.f32.mrb[0].mxu0
        %v1384 = vadd.f32 0.0, %v1383
        %v1385 = vpop.f32.mrb[0].mxu0
        %1386 = vmatprep.mubr.f32.mxu0 0.0
        %1387 = vmatmul.mubr.f32.gmra.mrb[0].mxu0 %v1259
        %v1388 = vpop.f32.mrb[0].mxu0
        %v1389 = vadd.f32 0.0, %v1388
        %v1390 = vpop.f32.mrb[0].mxu0
        %1391 = vmatprep.mubr.f32.mxu0 0.0
        %1392 = vmatmul.mubr.f32.gmra.mrb[0].mxu0 %v1262
        %v1393 = vpop.f32.mrb[0].mxu0
        %v1394 = vadd.f32 0.0, %v1393
        %v1395 = vpop.f32.mrb[0].mxu0
        %1396 = vmatprep.mubr.f32.mxu0 0.0
        %1397 = vmatmul.mubr.f32.gmra.mrb[0].mxu0 %v1265
        %v1398 = vpop.f32.mrb[0].mxu0
        %v1399 = vadd.f32 0.0, %v1398
        %v1400 = vpop.f32.mrb[0].mxu0
        %1401 = vmatprep.mubr.f32.mxu0 0.0
        %1402 = vmatmul.mubr.f32.gmra.mrb[0].mxu0 %v1268
        %v1403 = vpop.f32.mrb[0].mxu0
        %v1404 = vadd.f32 0.0, %v1403
        %v1405 = vpop.f32.mrb[0].mxu0
        %1406 = vmatprep.mubr.f32.mxu0 0.0
        %1407 = vmatmul.mubr.f32.gmra.mrb[0].mxu0 %v1271
        %v1408 = vpop.f32.mrb[0].mxu0
        %v1409 = vadd.f32 0.0, %v1408
        %v1410 = vpop.f32.mrb[0].mxu0
        %1411 = vmatprep.mubr.f32.mxu0 0.0
        %1412 = vmatmul.mubr.f32.gmra.mrb[0].mxu0 %v1274
        %v1413 = vpop.f32.mrb[0].mxu0
        %v1414 = vadd.f32 0.0, %v1413
        %v1415 = vpop.f32.mrb[0].mxu0
        %1416 = vmatprep.mubr.f32.mxu0 0.0
        %1417 = vmatmul.mubr.f32.gmra.mrb[0].mxu0 %v1277
        %v1418 = vpop.f32.mrb[0].mxu0
        %v1419 = vadd.f32 0.0, %v1418
        %v1420 = vpop.f32.mrb[0].mxu0
        %1421 = vmatprep.mubr.f32.mxu0 0.0
        %1422 = vmatmul.mubr.f32.gmra.mrb[0].mxu0 %v1280
        %v1423 = vpop.f32.mrb[0].mxu0
        %v1424 = vadd.f32 0.0, %v1423
        %v1425 = vpop.f32.mrb[0].mxu0
        %1426 = vmatprep.mubr.f32.mxu0 0.0
        %1427 = vmatmul.mubr.f32.gmra.mrb[0].mxu0 %v1283
        %v1428 = vpop.f32.mrb[0].mxu0
        %v1429 = vadd.f32 0.0, %v1428
        %v1430 = vpop.f32.mrb[0].mxu0
        %1431 = vmatprep.mubr.f32.mxu0 0.0
        %1432 = vmatmul.mubr.f32.gmra.mrb[0].mxu0 %v1286
        %v1433 = vpop.f32.mrb[0].mxu0
        %v1434 = vadd.f32 0.0, %v1433
        %v1435 = vpop.f32.mrb[0].mxu0
        %1436 = vmatprep.mubr.f32.mxu0 0.0
        %1437 = vmatmul.mubr.f32.gmra.mrb[0].mxu0 %v1289
        %v1438 = vpop.f32.mrb[0].mxu0
        %v1439 = vadd.f32 0.0, %v1438
        %v1440 = vpop.f32.mrb[0].mxu0
        %1441 = vmatprep.mubr.f32.mxu0 0.0
        %1442 = vmatmul.mubr.f32.gmra.mrb[0].mxu0 %v1292
        %v1443 = vpop.f32.mrb[0].mxu0
        %v1444 = vadd.f32 0.0, %v1443
        %v1445 = vpop.f32.mrb[0].mxu0
        %1446 = vmatprep.mubr.f32.mxu0 0.0
        %1447 = vmatmul.mubr.f32.gmra.mrb[0].mxu0 %v1295
        %v1448 = vpop.f32.mrb[0].mxu0
        %v1449 = vadd.f32 0.0, %v1448
        %v1450 = vpop.f32.mrb[0].mxu0
        %1451 = vmatprep.mubr.f32.mxu0 0.0
        %1452 = vmatmul.mubr.f32.gmra.mrb[0].mxu0 %v1298
        %v1453 = vpop.f32.mrb[0].mxu0
        %v1454 = vadd.f32 0.0, %v1453
        %v1455 = vpop.f32.mrb[0].mxu0
        %1456 = vdwg.mxu0
        %v1457 = vld [vmem:[%s328] sm:$0xff]
        %v1458 = vld [vmem:[%s328 + $0x8] sm:$0xff]
        %1475 = vrot.lane.b32.xlu0 %v881, 96
        %v1476 = vpop.permute.xlu0 %1475
        %1477 = vrot.lane.b32.xlu0 %v886, 96
        %v1478 = vpop.permute.xlu0 %1477
        %1479 = vrot.lane.b32.xlu0 %v891, 96
        %v1480 = vpop.permute.xlu0 %1479
        %1481 = vrot.lane.b32.xlu0 %v896, 96
        %v1482 = vpop.permute.xlu0 %1481
        %1483 = vrot.lane.b32.xlu0 %v901, 96
        %v1484 = vpop.permute.xlu0 %1483
        %1485 = vrot.lane.b32.xlu0 %v906, 96
        %v1486 = vpop.permute.xlu0 %1485
        %1487 = vrot.lane.b32.xlu0 %v911, 96
        %v1488 = vpop.permute.xlu0 %1487
        %1489 = vrot.lane.b32.xlu0 %v916, 96
        %v1490 = vpop.permute.xlu0 %1489
        %1491 = vrot.lane.b32.xlu0 %v921, 96
        %v1492 = vpop.permute.xlu0 %1491
        %1493 = vrot.lane.b32.xlu0 %v926, 96
        %v1494 = vpop.permute.xlu0 %1493
        %1495 = vrot.lane.b32.xlu0 %v931, 96
        %v1496 = vpop.permute.xlu0 %1495
        %1497 = vrot.lane.b32.xlu0 %v936, 96
        %v1498 = vpop.permute.xlu0 %1497
        %1499 = vrot.lane.b32.xlu0 %v941, 96
        %v1500 = vpop.permute.xlu0 %1499
        %1501 = vrot.lane.b32.xlu0 %v946, 96
        %v1502 = vpop.permute.xlu0 %1501
        %1503 = vrot.lane.b32.xlu0 %v951, 96
        %v1504 = vpop.permute.xlu0 %1503
        %1505 = vrot.lane.b32.xlu0 %v956, 96
        %v1506 = vpop.permute.xlu0 %1505
        %v1523 = vmul.f32 %v1379, %v1476
        %v1524 = vmul.f32 %v1384, %v1478
        %v1525 = vmul.f32 %v1389, %v1480
        %v1526 = vmul.f32 %v1394, %v1482
        %v1527 = vmul.f32 %v1399, %v1484
        %v1528 = vmul.f32 %v1404, %v1486
        %v1529 = vmul.f32 %v1409, %v1488
        %v1530 = vmul.f32 %v1414, %v1490
        %v1531 = vmul.f32 %v1419, %v1492
        %v1532 = vmul.f32 %v1424, %v1494
        %v1533 = vmul.f32 %v1429, %v1496
        %v1534 = vmul.f32 %v1434, %v1498
        %v1535 = vmul.f32 %v1439, %v1500
        %v1536 = vmul.f32 %v1444, %v1502
        %v1537 = vmul.f32 %v1449, %v1504
        %v1538 = vmul.f32 %v1454, %v1506
        %1539 = vxpose.xlu0.b32.start [1/16] %v456, 128
        %1540 = vxpose.xlu0.b32.cont [2/16] %v457, 128
        %1541 = vxpose.xlu0.b32.cont [3/16] %v458, 128
        %1542 = vxpose.xlu0.b32.cont [4/16] %v459, 128
        %1543 = vxpose.xlu0.b32.cont [5/16] %v460, 128
        %1544 = vxpose.xlu0.b32.cont [6/16] %v461, 128
        %1545 = vxpose.xlu0.b32.cont [7/16] %v462, 128
        %1546 = vxpose.xlu0.b32.cont [8/16] %v463, 128
        %1547 = vxpose.xlu0.b32.cont [9/16] %v464, 128
        %1548 = vxpose.xlu0.b32.cont [10/16] %v465, 128
        %1549 = vxpose.xlu0.b32.cont [11/16] %v466, 128
        %1550 = vxpose.xlu0.b32.cont [12/16] %v467, 128
        %1551 = vxpose.xlu0.b32.cont [13/16] %v468, 128
        %1552 = vxpose.xlu0.b32.cont [14/16] %v469, 128
        %1553 = vxpose.xlu0.b32.cont [15/16] %v470, 128
        %1554 = vxpose.xlu0.b32.end [16/16] %v471, 128
        %v1555 = vpop.trf.xlu0
        %v1556 = vpop.trf.xlu0
        %v1557 = vpop.trf.xlu0
        %v1558 = vpop.trf.xlu0
        %v1559 = vpop.trf.xlu0
        %v1560 = vpop.trf.xlu0
        %v1561 = vpop.trf.xlu0
        %v1562 = vpop.trf.xlu0
        %v1563 = vpop.trf.xlu0
        %v1564 = vpop.trf.xlu0
        %v1565 = vpop.trf.xlu0
        %v1566 = vpop.trf.xlu0
        %v1567 = vpop.trf.xlu0
        %v1568 = vpop.trf.xlu0
        %v1569 = vpop.trf.xlu0
        %v1570 = vpop.trf.xlu0
        %1571 = vmatprep.subr.mxu0 0.0
        %1572 = vmatpush1.msra.mxu0 %v1523
        %1573 = vmatprep.subr.mxu0 0.0
        %1574 = vmatpush1.msra.mxu0 %v1524
        %1575 = vmatprep.subr.mxu0 0.0
        %1576 = vmatpush1.msra.mxu0 %v1525
        %1577 = vmatprep.subr.mxu0 0.0
        %1578 = vmatpush1.msra.mxu0 %v1526
        %1579 = vmatprep.subr.mxu0 0.0
        %1580 = vmatpush1.msra.mxu0 %v1527
        %1581 = vmatprep.subr.mxu0 0.0
        %1582 = vmatpush1.msra.mxu0 %v1528
        %1583 = vmatprep.subr.mxu0 0.0
        %1584 = vmatpush1.msra.mxu0 %v1529
        %1585 = vmatprep.subr.mxu0 0.0
        %1586 = vmatpush1.msra.mxu0 %v1530
        %1587 = vmatprep.subr.mxu0 0.0
        %1588 = vmatpush1.msra.mxu0 %v1531
        %1589 = vmatprep.subr.mxu0 0.0
        %1590 = vmatpush1.msra.mxu0 %v1532
        %1591 = vmatprep.subr.mxu0 0.0
        %1592 = vmatpush1.msra.mxu0 %v1533
        %1593 = vmatprep.subr.mxu0 0.0
        %1594 = vmatpush1.msra.mxu0 %v1534
        %1595 = vmatprep.subr.mxu0 0.0
        %1596 = vmatpush1.msra.mxu0 %v1535
        %1597 = vmatprep.subr.mxu0 0.0
        %1598 = vmatpush1.msra.mxu0 %v1536
        %1599 = vmatprep.subr.mxu0 0.0
        %1600 = vmatpush1.msra.mxu0 %v1537
        %1601 = vmatprep.subr.mxu0 0.0
        %1602 = vmatpush1.msra.mxu0 %v1538
        %1603 = vmatprep.subr.mxu0 0.0
        %1604 = vmatpush1.msra.mxu0 0.0
        %1605 = vmatprep.subr.mxu0 0.0
        %1606 = vmatpush1.msra.mxu0 0.0
        %1607 = vmatprep.subr.mxu0 0.0
        %1608 = vmatpush1.msra.mxu0 0.0
        %1609 = vmatprep.subr.mxu0 0.0
        %1610 = vmatpush1.msra.mxu0 0.0
        %1611 = vmatprep.subr.mxu0 0.0
        %1612 = vmatpush1.msra.mxu0 0.0
        %1613 = vmatprep.subr.mxu0 0.0
        %1614 = vmatpush1.msra.mxu0 0.0
        %1615 = vmatprep.subr.mxu0 0.0
        %1616 = vmatpush1.msra.mxu0 0.0
        %1617 = vmatprep.subr.mxu0 0.0
        %1618 = vmatpush1.msra.mxu0 0.0
        %1619 = vmatprep.subr.mxu0 0.0
        %1620 = vmatpush1.msra.mxu0 0.0
        %1621 = vmatprep.subr.mxu0 0.0
        %1622 = vmatpush1.msra.mxu0 0.0
        %1623 = vmatprep.subr.mxu0 0.0
        %1624 = vmatpush1.msra.mxu0 0.0
        %1625 = vmatprep.subr.mxu0 0.0
        %1626 = vmatpush1.msra.mxu0 0.0
        %1627 = vmatprep.subr.mxu0 0.0
        %1628 = vmatpush1.msra.mxu0 0.0
        %1629 = vmatprep.subr.mxu0 0.0
        %1630 = vmatpush1.msra.mxu0 0.0
        %1631 = vmatprep.subr.mxu0 0.0
        %1632 = vmatpush1.msra.mxu0 0.0
        %1633 = vmatprep.subr.mxu0 0.0
        %1634 = vmatpush1.msra.mxu0 0.0
        %1635 = vmatprep.mubr.f32.mxu0 0.0
        %1636 = vmatmul.mubr.f32.gmra.mrb[0].mxu0 %v1555
        %v1637 = vpop.f32.mrb[0].mxu0
        %v1638 = vadd.f32 0.0, %v1637
        %v1639 = vpop.f32.mrb[0].mxu0
        %1640 = vmatprep.mubr.f32.mxu0 0.0
        %1641 = vmatmul.mubr.f32.gmra.mrb[0].mxu0 %v1556
        %v1642 = vpop.f32.mrb[0].mxu0
        %v1643 = vadd.f32 0.0, %v1642
        %v1644 = vpop.f32.mrb[0].mxu0
        %1645 = vdwg.mxu0
        %v1646 = vadd.f32 %v1457, %v1638
        %v1647 = vadd.f32 %v1458, %v1643
        %1648 = vst.msk [vmem:[%s328] sm:$0xff] %vm1011, %v1646
        %1649 = vst.msk [vmem:[%s328 + $0x8] sm:$0xff] %vm1011, %v1647
        %s1650 = sand.u32 %s168, 1
        %s1651 = scalar_lea.sflag [#allocation3], %s1650
        %s1652 = sand.u32 %s168, 1
        %s1653 = smul.addr %s1652, 16
        %s1654 = scalar_lea.vmem [#allocation2], %s1653
        %s1655 = sand.u32 %s25, 1
        %s1656 = scalar_lea.sflag [#allocation5], %s1655
        %s1657 = sand.u32 %s194, 1
        %s1658 = smul.addr %s1657, 4
        %s1659 = scalar_lea.vmem [#allocation4], %s1658
        %s1660 = sand.u32 %s25, 1
        %s1661 = scalar_lea.sflag [#allocation5], %s1660
        %s1662 = sand.u32 %s224, 1
        %s1663 = smul.addr %s1662, 4
        %s1664 = scalar_lea.vmem [#allocation6], %s1663
        // Predicated region
        $region45: #{tpu_custom_call.1} parent=39 // pred_check
          %p1665 = pneg %p178
        $region46: #{tpu_custom_call.1} parent=39 // pred_check_branch
          %1667 = sbr.rel (%p1665) target = $region48
        $region47: #{tpu_custom_call.1} parent=39 // pred_region
          %s1669 = ssub.s32 256, 256
          %1670 = vsyncadd %s1651, %s1669
          %s1671 = smul.addr %s29, 2
          %s1672 = smul.addr %s1671, 128
          %s1673 = scalar_lea.hbm %s5, %s1672
          %s1674 = sshll.u32 %s1654, 4
          %s1675 = int_to_ptr.vmem [resolvable:$true] %s1674
          %1680 = dma.vmem_to_hbm [thread:$0]  %s1675, 256, %s1673, %s1651, 128, 128, 8
        $region48: #{tpu_custom_call.1} parent=39 // pred_fallthru
          _
        // Predicated region
        $region49: #{tpu_custom_call.1} parent=39 // pred_check
          %p1681 = pneg %p204
        $region50: #{tpu_custom_call.1} parent=39 // pred_check_branch
          %1683 = sbr.rel (%p1681) target = $region52
        $region51: #{tpu_custom_call.1} parent=39 // pred_region
          %s1685 = ssub.s32 64, 64
          %1686 = vsyncadd %s1656, %s1685
          %s1687 = smul.addr %s29, 64
          %s1688 = scalar_lea.hbm %s6, %s1687
          %s1690 = sshll.u32 %s1659, 4
          %s1691 = int_to_ptr.vmem [resolvable:$true] %s1690
          %1693 = dma.vmem_to_hbm [thread:$0]  %s1691, 64, %s1688, %s1656
        $region52: #{tpu_custom_call.1} parent=39 // pred_fallthru
          _
        // Predicated region
        $region53: #{tpu_custom_call.1} parent=39 // pred_check
          %p1694 = pneg %p234
        $region54: #{tpu_custom_call.1} parent=39 // pred_check_branch
          %1696 = sbr.rel (%p1694) target = $region56
        $region55: #{tpu_custom_call.1} parent=39 // pred_region
          %s1697 = smul.u32 %s29, 3
          %s1698 = sadd.s32 %s1697, %s30
          %s1700 = ssub.s32 64, 64
          %1701 = vsyncadd %s1661, %s1700
          %s1702 = smul.addr %s1698, 64
          %s1703 = scalar_lea.hbm %s7, %s1702
          %s1705 = sshll.u32 %s1664, 4
          %s1706 = int_to_ptr.vmem [resolvable:$true] %s1705
          %1708 = dma.vmem_to_hbm [thread:$0]  %s1706, 64, %s1703, %s1661
        $region56: #{tpu_custom_call.1} parent=39 // pred_fallthru
          _
      $region40: #{tpu_custom_call.1} parent=5 // pred_fallthru
        _
      %p1709 = scmp.le.s32.totalorder 2, %s20
      // Predicated region
      $region57: #{tpu_custom_call.1} parent=5 // pred_check
        %p1710 = pneg %p1709
      $region58: #{tpu_custom_call.1} parent=5 // pred_check_branch
        %1712 = sbr.rel (%p1710) target = $region60
      $region59: #{tpu_custom_call.1} parent=5 // pred_region
        %s1713 = ssub.s32 %s20, 2
        // Predicated region
        $region61: #{tpu_custom_call.1} parent=59 // pred_check
          %p1714 = pneg %p184
        $region62: #{tpu_custom_call.1} parent=59 // pred_check_branch
          %1716 = sbr.rel (%p1714) target = $region64
        $region63: #{tpu_custom_call.1} parent=59 // pred_region
          %s1717 = sand.u32 %s169, 1
          %s1718 = scalar_lea.sflag [#allocation3], %s1717
          %s1719 = sand.u32 %s169, 1
          %s1720 = smul.addr %s1719, 16
          %s1721 = scalar_lea.vmem [#allocation2], %s1720
          %1722 = dma.done %s1718, 256
        $region64: #{tpu_custom_call.1} parent=59 // pred_fallthru
          _
        // Predicated region
        $region65: #{tpu_custom_call.1} parent=59 // pred_check
          %p1723 = pneg %p210
        $region66: #{tpu_custom_call.1} parent=59 // pred_check_branch
          %1725 = sbr.rel (%p1723) target = $region68
        $region67: #{tpu_custom_call.1} parent=59 // pred_region
          %s1726 = sand.u32 %s26, 1
          %s1727 = scalar_lea.sflag [#allocation5], %s1726
          %s1728 = sand.u32 %s195, 1
          %s1729 = smul.addr %s1728, 4
          %s1730 = scalar_lea.vmem [#allocation4], %s1729
          %1731 = dma.done %s1727, 64
        $region68: #{tpu_custom_call.1} parent=59 // pred_fallthru
          _
        // Predicated region
        $region69: #{tpu_custom_call.1} parent=59 // pred_check
          %p1732 = pneg %p240
        $region70: #{tpu_custom_call.1} parent=59 // pred_check_branch
          %1734 = sbr.rel (%p1732) target = $region72
        $region71: #{tpu_custom_call.1} parent=59 // pred_region
          %s1735 = sand.u32 %s26, 1
          %s1736 = scalar_lea.sflag [#allocation5], %s1735
          %s1737 = sand.u32 %s225, 1
          %s1738 = smul.addr %s1737, 4
          %s1739 = scalar_lea.vmem [#allocation6], %s1738
          %1740 = dma.done %s1736, 64
        $region72: #{tpu_custom_call.1} parent=59 // pred_fallthru
          _
      $region60: #{tpu_custom_call.1} parent=5 // pred_fallthru
        _
    $region6: #{tpu_custom_call.1} parent=1 // loop_footer
      %s24 = sadd.s32 1, %s20
    $region7: #{tpu_custom_call.1} parent=1 // loop_footer_branch
      %19 = sbr.rel target = $region3
    $region8: #{tpu_custom_call.1} parent=1 // loop_exit
      _
    %1741 = vsyncpa [#allocation3], 1
    %s1742 = scalar_lea.sflag [#allocation3], 1
    %1743 = vsyncpa %s1742, 1
    %1744 = vsyncpa [#allocation5], 1
    %s1745 = scalar_lea.sflag [#allocation5], 1
    %1746 = vsyncpa %s1745, 1

</llo_original>
